<compile_context>
chip_gen: v7x
topology: tpu7x:2x2x1
jax: 0.10.0
libtpu: 0.0.40
codegen_flags: <defaults>
</compile_context>

<pallas_src>
import math

import jax
import jax.numpy as jnp
from jax.experimental import pallas as pl
from jax.experimental.pallas import tpu as pltpu  # noqa: F401  (kept for parity)

# ---- model hyper-parameters (small, consistent with the module) -------------
S = 8        # sequence length
B = 2        # batch
D = 32       # d_model
NHEAD = 4    # attention heads
HD = D // NHEAD
FFN = 64     # dim_feedforward
O = 8        # decoder output dim
LN_EPS = 1e-5
NEG = -1e9   # finite "minus infinity" for the cross-batch attention mask

BS = B * S   # 16 tokens processed in one shot


def _layernorm(h, g, b):
    mu = jnp.mean(h, axis=-1, keepdims=True)
    var = jnp.mean((h - mu) ** 2, axis=-1, keepdims=True)
    return (h - mu) * jax.lax.rsqrt(var + LN_EPS) * g + b


def signal_transformer_kernel(x_ref, pe_ref, w_ref, bv_ref, out_ref):
    """x_ref: (B*S, D) tokens, pe_ref: (B*S, D), w_ref: (128,128) weight slab,
    bv_ref: (32,128) bias/LN/mask slab, out_ref: (B*S, O)."""
    # ---- unpack lane-dense weight slab (static, sublane-aligned slices) -----
    w_in  = w_ref[0:D, 0:3 * D]             # (32, 96)  in_proj^T (Q cols pre-scaled)
    w_dec = w_ref[0:D, 3 * D:3 * D + O]     # (32, 8)   decoder^T
    w_out = w_ref[D:2 * D, 0:D]             # (32, 32)  out_proj^T
    w_ff1 = w_ref[D:2 * D, D:D + FFN]       # (32, 64)  linear1^T
    w_ff2 = w_ref[2 * D:2 * D + FFN, 0:D]   # (64, 32)  linear2^T

    # ---- unpack bias / LN / mask slab ----------------------------------------
    b_in  = bv_ref[0:1, 0:3 * D]            # Q portion pre-scaled by 1/sqrt(HD)
    b_out = bv_ref[1:2, 0:D]
    g1    = bv_ref[2:3, 0:D]
    bt1   = bv_ref[3:4, 0:D]
    g2    = bv_ref[4:5, 0:D]
    bt2   = bv_ref[5:6, 0:D]
    b_ff1 = bv_ref[6:7, 0:FFN]
    b_ff2 = bv_ref[7:8, 0:D]
    b_dec = bv_ref[8:9, 0:O]
    attn_mask = bv_ref[16:16 + BS, 0:BS]    # (16, 16) block-diag: 0 / -1e9

    # ---- sig_encoder is None: h = x ; positional encoder: h = x + pe --------
    h = x_ref[...] + pe_ref[...]                                    # (BS, D)

    # ---- multi-head self attention (nn.MultiheadAttention, eval) ------------
    qkv = jnp.dot(h, w_in, preferred_element_type=jnp.float32) + b_in  # (BS, 3D)
    q = qkv[:, 0:D]
    k = qkv[:, D:2 * D]
    v = qkv[:, 2 * D:3 * D]

    attn = None
    for hh in range(NHEAD):                 # static unroll over heads only
        c0 = hh * HD
        qh = q[:, c0:c0 + HD]               # (16, 8), already scaled
        kh = k[:, c0:c0 + HD]               # (16, 8)
        vh = v[:, c0:c0 + HD]               # (16, 8)
        # scores over all 16 tokens at once; cross-batch blocks masked out.
        sc = jax.lax.dot_general(qh, kh, (((1,), (1,)), ((), ())),
                                 preferred_element_type=jnp.float32)   # (16,16)
        sc = sc + attn_mask
        sc = sc - jnp.max(sc, axis=-1, keepdims=True)
        p = jnp.exp(sc)                     # masked entries underflow to 0
        ssum = jnp.sum(p, axis=-1, keepdims=True)
        r = pl.reciprocal(ssum, approx=True)        # EUP slot
        r = r * (2.0 - ssum * r)                    # one Newton step ~2^-24
        # deferred normalization: (p @ v) * r  == softmax(p) @ v
        o_h = jnp.dot(p, vh, preferred_element_type=jnp.float32) * r   # (16, 8)
        # fold out-projection per head; accumulate in registers (no scratch).
        contrib = jnp.dot(o_h, w_out[c0:c0 + HD, :],
                          preferred_element_type=jnp.float32)          # (16, D)
        attn = contrib if attn is None else attn + contrib
    attn = attn + b_out

    # ---- residual + norm1 (post-norm, dropout=0) -----------------------------
    h = _layernorm(h + attn, g1, bt1)

    # ---- feed-forward: linear2(relu(linear1(h))) -----------------------------
    f = jnp.dot(h, w_ff1, preferred_element_type=jnp.float32) + b_ff1
    f = jnp.maximum(f, 0.0)
    f = jnp.dot(f, w_ff2, preferred_element_type=jnp.float32) + b_ff2

    # ---- residual + norm2 -----------------------------------------------------
    h = _layernorm(h + f, g2, bt2)

    # ---- decoder linear (per-token; permute(1,0,2) handled by row layout) ----
    out = jnp.dot(h, w_dec, preferred_element_type=jnp.float32) + b_dec
    out_ref[...] = out.astype(out_ref.dtype)        # single (16, 8) store


# -----------------------------------------------------------------------------
# host-side parameter construction / packing
# -----------------------------------------------------------------------------
def make_params(key):
    ks = jax.random.split(key, 8)

    def xavier(k, shape):
        fan_in, fan_out = shape[1], shape[0]
        lim = math.sqrt(6.0 / (fan_in + fan_out))
        return jax.random.uniform(k, shape, jnp.float32, -lim, lim)

    return dict(
        in_proj_w=xavier(ks[0], (3 * D, D)),
        in_proj_b=jnp.zeros((1, 3 * D), jnp.float32),
        out_proj_w=xavier(ks[1], (D, D)),
        out_proj_b=jnp.zeros((1, D), jnp.float32),
        ln1_g=jnp.ones((1, D), jnp.float32),
        ln1_b=jnp.zeros((1, D), jnp.float32),
        ln2_g=jnp.ones((1, D), jnp.float32),
        ln2_b=jnp.zeros((1, D), jnp.float32),
        lin1_w=xavier(ks[2], (FFN, D)),
        lin1_b=jax.random.normal(ks[3], (1, FFN), jnp.float32) * 0.02,
        lin2_w=xavier(ks[4], (D, FFN)),
        lin2_b=jax.random.normal(ks[5], (1, D), jnp.float32) * 0.02,
        dec_w=xavier(ks[6], (O, D)),
        dec_b=jax.random.normal(ks[7], (1, O), jnp.float32) * 0.02,
    )


def pack_params(p):
    """Pack pre-transposed weights into one lane-dense (128,128) slab and all
    biases / LN vectors / the block-diagonal attention mask into a (32,128)
    slab -> exactly 2 parameter DMAs for the kernel."""
    scale = 1.0 / math.sqrt(HD)

    in_proj_wT = p["in_proj_w"].T                        # (D, 3D)
    in_proj_wT = in_proj_wT.at[:, 0:D].multiply(scale)   # fold softmax scale (Q)
    in_proj_b = p["in_proj_b"].at[:, 0:D].multiply(scale)

    W = jnp.zeros((128, 128), jnp.float32)
    W = W.at[0:D, 0:3 * D].set(in_proj_wT)               # (32, 96)
    W = W.at[0:D, 3 * D:3 * D + O].set(p["dec_w"].T)     # (32, 8)
    W = W.at[D:2 * D, 0:D].set(p["out_proj_w"].T)        # (32, 32)
    W = W.at[D:2 * D, D:D + FFN].set(p["lin1_w"].T)      # (32, 64)
    W = W.at[2 * D:2 * D + FFN, 0:D].set(p["lin2_w"].T)  # (64, 32)

    batch_id = jnp.arange(BS, dtype=jnp.int32) // S
    mask = jnp.where(batch_id[:, None] == batch_id[None, :],
                     0.0, NEG).astype(jnp.float32)       # (16, 16) block diagonal

    BV = jnp.zeros((32, 128), jnp.float32)
    BV = BV.at[0:1, 0:3 * D].set(in_proj_b)
    BV = BV.at[1:2, 0:D].set(p["out_proj_b"])
    BV = BV.at[2:3, 0:D].set(p["ln1_g"])
    BV = BV.at[3:4, 0:D].set(p["ln1_b"])
    BV = BV.at[4:5, 0:D].set(p["ln2_g"])
    BV = BV.at[5:6, 0:D].set(p["ln2_b"])
    BV = BV.at[6:7, 0:FFN].set(p["lin1_b"])
    BV = BV.at[7:8, 0:D].set(p["lin2_b"])
    BV = BV.at[8:9, 0:O].set(p["dec_b"])
    BV = BV.at[16:16 + BS, 0:BS].set(mask)
    return W, BV


def sinusoidal_pe(seq_len, d_model):
    pos = jnp.arange(seq_len, dtype=jnp.float32)[:, None]
    i2 = jnp.arange(0, d_model, 2, dtype=jnp.float32)[None, :]
    div = jnp.exp(-i2 * math.log(10000.0) / d_model)
    pe = jnp.zeros((seq_len, d_model), jnp.float32)
    pe = pe.at[:, 0::2].set(jnp.sin(pos * div))
    pe = pe.at[:, 1::2].set(jnp.cos(pos * div))
    return pe


# -----------------------------------------------------------------------------
# wrappers
# -----------------------------------------------------------------------------
def signal_transformer_pallas(x_sbd, pe_flat, w_slab, bias_slab):
    """x_sbd: (S, B, D) PyTorch-convention input. Returns (B, S, O)."""
    # layout plumbing (XLA side): batch-major token matrix (B*S, D)
    x_flat = jnp.transpose(x_sbd, (1, 0, 2)).reshape(BS, D)

    out_flat = pl.pallas_call(
        signal_transformer_kernel,
        out_shape=jax.ShapeDtypeStruct((BS, O), jnp.float32),
    )(x_flat, pe_flat, w_slab, bias_slab)

    return out_flat.reshape(B, S, O)


def signal_transformer_ref(x_sbd, params, pe):
    """Pure-JAX reference mirroring PyTorch eval-mode semantics."""
    p = params
    h = x_sbd + pe[:, None, :]                                # pos encoder
    hs = jnp.transpose(h, (1, 0, 2))                          # (B, S, D)
    qkv = jnp.einsum("bsd,ed->bse", hs, p["in_proj_w"]) + p["in_proj_b"]
    q, k, v = qkv[..., :D], qkv[..., D:2 * D], qkv[..., 2 * D:]
    qh = q.reshape(B, S, NHEAD, HD).transpose(0, 2, 1, 3)
    kh = k.reshape(B, S, NHEAD, HD).transpose(0, 2, 1, 3)
    vh = v.reshape(B, S, NHEAD, HD).transpose(0, 2, 1, 3)
    sc = jnp.einsum("bhqe,bhke->bhqk", qh, kh) / math.sqrt(HD)
    w = jax.nn.softmax(sc, axis=-1)
    a = jnp.einsum("bhqk,bhke->bhqe", w, vh).transpose(0, 2, 1, 3).reshape(B, S, D)
    a = jnp.einsum("bsd,ed->bse", a, p["out_proj_w"]) + p["out_proj_b"]

    def ln(x, g, b):
        mu = x.mean(-1, keepdims=True)
        var = ((x - mu) ** 2).mean(-1, keepdims=True)
        return (x - mu) / jnp.sqrt(var + LN_EPS) * g + b

    hs = ln(hs + a, p["ln1_g"], p["ln1_b"])
    f = jnp.maximum(jnp.einsum("bsd,fd->bsf", hs, p["lin1_w"]) + p["lin1_b"], 0.0)
    f = jnp.einsum("bsf,df->bsd", f, p["lin2_w"]) + p["lin2_b"]
    hs = ln(hs + f, p["ln2_g"], p["ln2_b"])
    return jnp.einsum("bsd,od->bso", hs, p["dec_w"]) + p["dec_b"]


if __name__ == "__main__":
    key = jax.random.PRNGKey(0)
    kx, kp = jax.random.split(key)
    x = jax.random.normal(kx, (S, B, D), jnp.float32)     # (seq, batch, d_model)
    params = make_params(kp)
    pe = sinusoidal_pe(S, D)

    # one-time host-side packing (weights are loop-invariant)
    w_slab, bias_slab = pack_params(params)
    pe_flat = jnp.tile(pe, (B, 1))                         # (B*S, D)

    out = signal_transformer_pallas(x, pe_flat, w_slab, bias_slab)
    out = jax.block_until_ready(out)

    ref = signal_transformer_ref(x, params, pe)
    assert out.shape == (B, S, O)
    assert jnp.allclose(out, ref, rtol=1e-4, atol=1e-4)
    print("KERNEL_OK")
</pallas_src>

<mosaic_0001>
module attributes {stable_mosaic.version = 11 : i64} {
  func.func @signal_transformer_kernel(%arg0: memref<16x32xf32, #tpu.memory_space<vmem>>, %arg1: memref<16x32xf32, #tpu.memory_space<vmem>>, %arg2: memref<128x128xf32, #tpu.memory_space<vmem>>, %arg3: memref<32x128xf32, #tpu.memory_space<vmem>>, %arg4: memref<16x8xf32, #tpu.memory_space<vmem>>) attributes {dimension_semantics = [], scalar_prefetch = 0 : i64, scratch_operands = 0 : i64, tpu.core_type = #tpu.core_type<tc>} {
    %c0 = arith.constant 0 : index
    %c0_0 = arith.constant 0 : index
    %0 = vector.load %arg2[%c0, %c0_0] : memref<128x128xf32, #tpu.memory_space<vmem>>, vector<32x96xf32>
    %c0_1 = arith.constant 0 : index
    %c96 = arith.constant 96 : index
    %1 = vector.load %arg2[%c0_1, %c96] : memref<128x128xf32, #tpu.memory_space<vmem>>, vector<32x8xf32>
    %c32 = arith.constant 32 : index
    %c0_2 = arith.constant 0 : index
    %2 = vector.load %arg2[%c32, %c0_2] : memref<128x128xf32, #tpu.memory_space<vmem>>, vector<32x32xf32>
    %c32_3 = arith.constant 32 : index
    %c32_4 = arith.constant 32 : index
    %3 = vector.load %arg2[%c32_3, %c32_4] : memref<128x128xf32, #tpu.memory_space<vmem>>, vector<32x64xf32>
    %c64 = arith.constant 64 : index
    %c0_5 = arith.constant 0 : index
    %4 = vector.load %arg2[%c64, %c0_5] : memref<128x128xf32, #tpu.memory_space<vmem>>, vector<64x32xf32>
    %c0_6 = arith.constant 0 : index
    %c0_7 = arith.constant 0 : index
    %5 = vector.load %arg3[%c0_6, %c0_7] : memref<32x128xf32, #tpu.memory_space<vmem>>, vector<1x96xf32>
    %c1 = arith.constant 1 : index
    %c0_8 = arith.constant 0 : index
    %6 = vector.load %arg3[%c1, %c0_8] : memref<32x128xf32, #tpu.memory_space<vmem>>, vector<1x32xf32>
    %c2 = arith.constant 2 : index
    %c0_9 = arith.constant 0 : index
    %7 = vector.load %arg3[%c2, %c0_9] : memref<32x128xf32, #tpu.memory_space<vmem>>, vector<1x32xf32>
    %c3 = arith.constant 3 : index
    %c0_10 = arith.constant 0 : index
    %8 = vector.load %arg3[%c3, %c0_10] : memref<32x128xf32, #tpu.memory_space<vmem>>, vector<1x32xf32>
    %c4 = arith.constant 4 : index
    %c0_11 = arith.constant 0 : index
    %9 = vector.load %arg3[%c4, %c0_11] : memref<32x128xf32, #tpu.memory_space<vmem>>, vector<1x32xf32>
    %c5 = arith.constant 5 : index
    %c0_12 = arith.constant 0 : index
    %10 = vector.load %arg3[%c5, %c0_12] : memref<32x128xf32, #tpu.memory_space<vmem>>, vector<1x32xf32>
    %c6 = arith.constant 6 : index
    %c0_13 = arith.constant 0 : index
    %11 = vector.load %arg3[%c6, %c0_13] : memref<32x128xf32, #tpu.memory_space<vmem>>, vector<1x64xf32>
    %c7 = arith.constant 7 : index
    %c0_14 = arith.constant 0 : index
    %12 = vector.load %arg3[%c7, %c0_14] : memref<32x128xf32, #tpu.memory_space<vmem>>, vector<1x32xf32>
    %c8 = arith.constant 8 : index
    %c0_15 = arith.constant 0 : index
    %13 = vector.load %arg3[%c8, %c0_15] : memref<32x128xf32, #tpu.memory_space<vmem>>, vector<1x8xf32>
    %c16 = arith.constant 16 : index
    %c0_16 = arith.constant 0 : index
    %14 = vector.load %arg3[%c16, %c0_16] : memref<32x128xf32, #tpu.memory_space<vmem>>, vector<16x16xf32>
    %c0_17 = arith.constant 0 : index
    %c0_18 = arith.constant 0 : index
    %15 = vector.load %arg0[%c0_17, %c0_18] : memref<16x32xf32, #tpu.memory_space<vmem>>, vector<16x32xf32>
    %c0_19 = arith.constant 0 : index
    %c0_20 = arith.constant 0 : index
    %16 = vector.load %arg1[%c0_19, %c0_20] : memref<16x32xf32, #tpu.memory_space<vmem>>, vector<16x32xf32>
    %17 = arith.addf %15, %16 : vector<16x32xf32>
    %cst = arith.constant dense<0.000000e+00> : vector<16x96xf32>
    %18 = tpu.matmul %17, %0, %cst {dimension_numbers = #tpu.dot_dimension_numbers<[1], [0], [0], [1], [0, 0, 1, 1], [], []>} : vector<16x32xf32>, vector<32x96xf32>, vector<16x96xf32> -> vector<16x96xf32>
    %19 = vector.broadcast %5 : vector<1x96xf32> to vector<16x96xf32>
    %20 = arith.addf %18, %19 : vector<16x96xf32>
    %21 = vector.extract_strided_slice %20 {offsets = [0, 0], sizes = [16, 32], strides = [1, 1]} : vector<16x96xf32> to vector<16x32xf32>
    %22 = vector.extract_strided_slice %20 {offsets = [0, 32], sizes = [16, 32], strides = [1, 1]} : vector<16x96xf32> to vector<16x32xf32>
    %23 = vector.extract_strided_slice %20 {offsets = [0, 64], sizes = [16, 32], strides = [1, 1]} : vector<16x96xf32> to vector<16x32xf32>
    %24 = vector.extract_strided_slice %21 {offsets = [0, 0], sizes = [16, 8], strides = [1, 1]} : vector<16x32xf32> to vector<16x8xf32>
    %25 = vector.extract_strided_slice %22 {offsets = [0, 0], sizes = [16, 8], strides = [1, 1]} : vector<16x32xf32> to vector<16x8xf32>
    %26 = vector.extract_strided_slice %23 {offsets = [0, 0], sizes = [16, 8], strides = [1, 1]} : vector<16x32xf32> to vector<16x8xf32>
    %cst_21 = arith.constant dense<0.000000e+00> : vector<16x16xf32>
    %27 = tpu.matmul %24, %25, %cst_21 {dimension_numbers = #tpu.dot_dimension_numbers<[1], [1], [0], [0], [0, 0, 1, 0], [], []>} : vector<16x8xf32>, vector<16x8xf32>, vector<16x16xf32> -> vector<16x16xf32>
    %28 = arith.addf %27, %14 : vector<16x16xf32>
    %cst_22 = arith.constant dense<0xFF800000> : vector<16xf32>
    %29 = vector.multi_reduction <maximumf>, %28, %cst_22 [1] : vector<16x16xf32> to vector<16xf32>
    %30 = vector.shape_cast %29 : vector<16xf32> to vector<16x1xf32>
    %31 = vector.broadcast %30 : vector<16x1xf32> to vector<16x16xf32>
    %32 = arith.subf %28, %31 : vector<16x16xf32>
    %33 = math.exp %32 : vector<16x16xf32>
    %cst_23 = arith.constant dense<0.000000e+00> : vector<16xf32>
    %34 = vector.multi_reduction <add>, %33, %cst_23 [1] : vector<16x16xf32> to vector<16xf32>
    %35 = vector.shape_cast %34 : vector<16xf32> to vector<16x1xf32>
    %36 = tpu.reciprocal %35 {approx = true} : vector<16x1xf32> -> vector<16x1xf32>
    %37 = arith.mulf %35, %36 : vector<16x1xf32>
    %cst_24 = arith.constant 2.000000e+00 : f32
    %38 = vector.broadcast %cst_24 : f32 to vector<16x1xf32>
    %39 = arith.subf %38, %37 : vector<16x1xf32>
    %40 = arith.mulf %36, %39 : vector<16x1xf32>
    %cst_25 = arith.constant dense<0.000000e+00> : vector<16x8xf32>
    %41 = tpu.matmul %33, %26, %cst_25 {dimension_numbers = #tpu.dot_dimension_numbers<[1], [0], [0], [1], [0, 0, 1, 1], [], []>} : vector<16x16xf32>, vector<16x8xf32>, vector<16x8xf32> -> vector<16x8xf32>
    %42 = vector.broadcast %40 : vector<16x1xf32> to vector<16x8xf32>
    %43 = arith.mulf %41, %42 : vector<16x8xf32>
    %44 = vector.extract_strided_slice %2 {offsets = [0, 0], sizes = [8, 32], strides = [1, 1]} : vector<32x32xf32> to vector<8x32xf32>
    %cst_26 = arith.constant dense<0.000000e+00> : vector<16x32xf32>
    %45 = tpu.matmul %43, %44, %cst_26 {dimension_numbers = #tpu.dot_dimension_numbers<[1], [0], [0], [1], [0, 0, 1, 1], [], []>} : vector<16x8xf32>, vector<8x32xf32>, vector<16x32xf32> -> vector<16x32xf32>
    %46 = vector.extract_strided_slice %21 {offsets = [0, 8], sizes = [16, 8], strides = [1, 1]} : vector<16x32xf32> to vector<16x8xf32>
    %47 = vector.extract_strided_slice %22 {offsets = [0, 8], sizes = [16, 8], strides = [1, 1]} : vector<16x32xf32> to vector<16x8xf32>
    %48 = vector.extract_strided_slice %23 {offsets = [0, 8], sizes = [16, 8], strides = [1, 1]} : vector<16x32xf32> to vector<16x8xf32>
    %cst_27 = arith.constant dense<0.000000e+00> : vector<16x16xf32>
    %49 = tpu.matmul %46, %47, %cst_27 {dimension_numbers = #tpu.dot_dimension_numbers<[1], [1], [0], [0], [0, 0, 1, 0], [], []>} : vector<16x8xf32>, vector<16x8xf32>, vector<16x16xf32> -> vector<16x16xf32>
    %50 = arith.addf %49, %14 : vector<16x16xf32>
    %cst_28 = arith.constant dense<0xFF800000> : vector<16xf32>
    %51 = vector.multi_reduction <maximumf>, %50, %cst_28 [1] : vector<16x16xf32> to vector<16xf32>
    %52 = vector.shape_cast %51 : vector<16xf32> to vector<16x1xf32>
    %53 = vector.broadcast %52 : vector<16x1xf32> to vector<16x16xf32>
    %54 = arith.subf %50, %53 : vector<16x16xf32>
    %55 = math.exp %54 : vector<16x16xf32>
    %cst_29 = arith.constant dense<0.000000e+00> : vector<16xf32>
    %56 = vector.multi_reduction <add>, %55, %cst_29 [1] : vector<16x16xf32> to vector<16xf32>
    %57 = vector.shape_cast %56 : vector<16xf32> to vector<16x1xf32>
    %58 = tpu.reciprocal %57 {approx = true} : vector<16x1xf32> -> vector<16x1xf32>
    %59 = arith.mulf %57, %58 : vector<16x1xf32>
    %cst_30 = arith.constant 2.000000e+00 : f32
    %60 = vector.broadcast %cst_30 : f32 to vector<16x1xf32>
    %61 = arith.subf %60, %59 : vector<16x1xf32>
    %62 = arith.mulf %58, %61 : vector<16x1xf32>
    %cst_31 = arith.constant dense<0.000000e+00> : vector<16x8xf32>
    %63 = tpu.matmul %55, %48, %cst_31 {dimension_numbers = #tpu.dot_dimension_numbers<[1], [0], [0], [1], [0, 0, 1, 1], [], []>} : vector<16x16xf32>, vector<16x8xf32>, vector<16x8xf32> -> vector<16x8xf32>
    %64 = vector.broadcast %62 : vector<16x1xf32> to vector<16x8xf32>
    %65 = arith.mulf %63, %64 : vector<16x8xf32>
    %66 = vector.extract_strided_slice %2 {offsets = [8, 0], sizes = [8, 32], strides = [1, 1]} : vector<32x32xf32> to vector<8x32xf32>
    %cst_32 = arith.constant dense<0.000000e+00> : vector<16x32xf32>
    %67 = tpu.matmul %65, %66, %cst_32 {dimension_numbers = #tpu.dot_dimension_numbers<[1], [0], [0], [1], [0, 0, 1, 1], [], []>} : vector<16x8xf32>, vector<8x32xf32>, vector<16x32xf32> -> vector<16x32xf32>
    %68 = arith.addf %45, %67 : vector<16x32xf32>
    %69 = vector.extract_strided_slice %21 {offsets = [0, 16], sizes = [16, 8], strides = [1, 1]} : vector<16x32xf32> to vector<16x8xf32>
    %70 = vector.extract_strided_slice %22 {offsets = [0, 16], sizes = [16, 8], strides = [1, 1]} : vector<16x32xf32> to vector<16x8xf32>
    %71 = vector.extract_strided_slice %23 {offsets = [0, 16], sizes = [16, 8], strides = [1, 1]} : vector<16x32xf32> to vector<16x8xf32>
    %cst_33 = arith.constant dense<0.000000e+00> : vector<16x16xf32>
    %72 = tpu.matmul %69, %70, %cst_33 {dimension_numbers = #tpu.dot_dimension_numbers<[1], [1], [0], [0], [0, 0, 1, 0], [], []>} : vector<16x8xf32>, vector<16x8xf32>, vector<16x16xf32> -> vector<16x16xf32>
    %73 = arith.addf %72, %14 : vector<16x16xf32>
    %cst_34 = arith.constant dense<0xFF800000> : vector<16xf32>
    %74 = vector.multi_reduction <maximumf>, %73, %cst_34 [1] : vector<16x16xf32> to vector<16xf32>
    %75 = vector.shape_cast %74 : vector<16xf32> to vector<16x1xf32>
    %76 = vector.broadcast %75 : vector<16x1xf32> to vector<16x16xf32>
    %77 = arith.subf %73, %76 : vector<16x16xf32>
    %78 = math.exp %77 : vector<16x16xf32>
    %cst_35 = arith.constant dense<0.000000e+00> : vector<16xf32>
    %79 = vector.multi_reduction <add>, %78, %cst_35 [1] : vector<16x16xf32> to vector<16xf32>
    %80 = vector.shape_cast %79 : vector<16xf32> to vector<16x1xf32>
    %81 = tpu.reciprocal %80 {approx = true} : vector<16x1xf32> -> vector<16x1xf32>
    %82 = arith.mulf %80, %81 : vector<16x1xf32>
    %cst_36 = arith.constant 2.000000e+00 : f32
    %83 = vector.broadcast %cst_36 : f32 to vector<16x1xf32>
    %84 = arith.subf %83, %82 : vector<16x1xf32>
    %85 = arith.mulf %81, %84 : vector<16x1xf32>
    %cst_37 = arith.constant dense<0.000000e+00> : vector<16x8xf32>
    %86 = tpu.matmul %78, %71, %cst_37 {dimension_numbers = #tpu.dot_dimension_numbers<[1], [0], [0], [1], [0, 0, 1, 1], [], []>} : vector<16x16xf32>, vector<16x8xf32>, vector<16x8xf32> -> vector<16x8xf32>
    %87 = vector.broadcast %85 : vector<16x1xf32> to vector<16x8xf32>
    %88 = arith.mulf %86, %87 : vector<16x8xf32>
    %89 = vector.extract_strided_slice %2 {offsets = [16, 0], sizes = [8, 32], strides = [1, 1]} : vector<32x32xf32> to vector<8x32xf32>
    %cst_38 = arith.constant dense<0.000000e+00> : vector<16x32xf32>
    %90 = tpu.matmul %88, %89, %cst_38 {dimension_numbers = #tpu.dot_dimension_numbers<[1], [0], [0], [1], [0, 0, 1, 1], [], []>} : vector<16x8xf32>, vector<8x32xf32>, vector<16x32xf32> -> vector<16x32xf32>
    %91 = arith.addf %68, %90 : vector<16x32xf32>
    %92 = vector.extract_strided_slice %21 {offsets = [0, 24], sizes = [16, 8], strides = [1, 1]} : vector<16x32xf32> to vector<16x8xf32>
    %93 = vector.extract_strided_slice %22 {offsets = [0, 24], sizes = [16, 8], strides = [1, 1]} : vector<16x32xf32> to vector<16x8xf32>
    %94 = vector.extract_strided_slice %23 {offsets = [0, 24], sizes = [16, 8], strides = [1, 1]} : vector<16x32xf32> to vector<16x8xf32>
    %cst_39 = arith.constant dense<0.000000e+00> : vector<16x16xf32>
    %95 = tpu.matmul %92, %93, %cst_39 {dimension_numbers = #tpu.dot_dimension_numbers<[1], [1], [0], [0], [0, 0, 1, 0], [], []>} : vector<16x8xf32>, vector<16x8xf32>, vector<16x16xf32> -> vector<16x16xf32>
    %96 = arith.addf %95, %14 : vector<16x16xf32>
    %cst_40 = arith.constant dense<0xFF800000> : vector<16xf32>
    %97 = vector.multi_reduction <maximumf>, %96, %cst_40 [1] : vector<16x16xf32> to vector<16xf32>
    %98 = vector.shape_cast %97 : vector<16xf32> to vector<16x1xf32>
    %99 = vector.broadcast %98 : vector<16x1xf32> to vector<16x16xf32>
    %100 = arith.subf %96, %99 : vector<16x16xf32>
    %101 = math.exp %100 : vector<16x16xf32>
    %cst_41 = arith.constant dense<0.000000e+00> : vector<16xf32>
    %102 = vector.multi_reduction <add>, %101, %cst_41 [1] : vector<16x16xf32> to vector<16xf32>
    %103 = vector.shape_cast %102 : vector<16xf32> to vector<16x1xf32>
    %104 = tpu.reciprocal %103 {approx = true} : vector<16x1xf32> -> vector<16x1xf32>
    %105 = arith.mulf %103, %104 : vector<16x1xf32>
    %cst_42 = arith.constant 2.000000e+00 : f32
    %106 = vector.broadcast %cst_42 : f32 to vector<16x1xf32>
    %107 = arith.subf %106, %105 : vector<16x1xf32>
    %108 = arith.mulf %104, %107 : vector<16x1xf32>
    %cst_43 = arith.constant dense<0.000000e+00> : vector<16x8xf32>
    %109 = tpu.matmul %101, %94, %cst_43 {dimension_numbers = #tpu.dot_dimension_numbers<[1], [0], [0], [1], [0, 0, 1, 1], [], []>} : vector<16x16xf32>, vector<16x8xf32>, vector<16x8xf32> -> vector<16x8xf32>
    %110 = vector.broadcast %108 : vector<16x1xf32> to vector<16x8xf32>
    %111 = arith.mulf %109, %110 : vector<16x8xf32>
    %112 = vector.extract_strided_slice %2 {offsets = [24, 0], sizes = [8, 32], strides = [1, 1]} : vector<32x32xf32> to vector<8x32xf32>
    %cst_44 = arith.constant dense<0.000000e+00> : vector<16x32xf32>
    %113 = tpu.matmul %111, %112, %cst_44 {dimension_numbers = #tpu.dot_dimension_numbers<[1], [0], [0], [1], [0, 0, 1, 1], [], []>} : vector<16x8xf32>, vector<8x32xf32>, vector<16x32xf32> -> vector<16x32xf32>
    %114 = arith.addf %91, %113 : vector<16x32xf32>
    %115 = vector.broadcast %6 : vector<1x32xf32> to vector<16x32xf32>
    %116 = arith.addf %114, %115 : vector<16x32xf32>
    %117 = arith.addf %17, %116 : vector<16x32xf32>
    %cst_45 = arith.constant dense<0.000000e+00> : vector<16xf32>
    %118 = vector.multi_reduction <add>, %117, %cst_45 [1] : vector<16x32xf32> to vector<16xf32>
    %119 = vector.shape_cast %118 : vector<16xf32> to vector<16x1xf32>
    %cst_46 = arith.constant 3.200000e+01 : f32
    %120 = vector.broadcast %cst_46 : f32 to vector<16x1xf32>
    %121 = arith.divf %119, %120 : vector<16x1xf32>
    %122 = vector.broadcast %121 : vector<16x1xf32> to vector<16x32xf32>
    %123 = arith.subf %117, %122 : vector<16x32xf32>
    %124 = arith.mulf %123, %123 : vector<16x32xf32>
    %cst_47 = arith.constant dense<0.000000e+00> : vector<16xf32>
    %125 = vector.multi_reduction <add>, %124, %cst_47 [1] : vector<16x32xf32> to vector<16xf32>
    %126 = vector.shape_cast %125 : vector<16xf32> to vector<16x1xf32>
    %cst_48 = arith.constant 3.200000e+01 : f32
    %127 = vector.broadcast %cst_48 : f32 to vector<16x1xf32>
    %128 = arith.divf %126, %127 : vector<16x1xf32>
    %129 = vector.broadcast %121 : vector<16x1xf32> to vector<16x32xf32>
    %130 = arith.subf %117, %129 : vector<16x32xf32>
    %cst_49 = arith.constant 9.99999974E-6 : f32
    %131 = vector.broadcast %cst_49 : f32 to vector<16x1xf32>
    %132 = arith.addf %128, %131 : vector<16x1xf32>
    %133 = math.rsqrt %132 : vector<16x1xf32>
    %134 = vector.broadcast %133 : vector<16x1xf32> to vector<16x32xf32>
    %135 = arith.mulf %130, %134 : vector<16x32xf32>
    %136 = vector.broadcast %7 : vector<1x32xf32> to vector<16x32xf32>
    %137 = arith.mulf %135, %136 : vector<16x32xf32>
    %138 = vector.broadcast %8 : vector<1x32xf32> to vector<16x32xf32>
    %139 = arith.addf %137, %138 : vector<16x32xf32>
    %cst_50 = arith.constant dense<0.000000e+00> : vector<16x64xf32>
    %140 = tpu.matmul %139, %3, %cst_50 {dimension_numbers = #tpu.dot_dimension_numbers<[1], [0], [0], [1], [0, 0, 1, 1], [], []>} : vector<16x32xf32>, vector<32x64xf32>, vector<16x64xf32> -> vector<16x64xf32>
    %141 = vector.broadcast %11 : vector<1x64xf32> to vector<16x64xf32>
    %142 = arith.addf %140, %141 : vector<16x64xf32>
    %cst_51 = arith.constant 0.000000e+00 : f32
    %143 = vector.broadcast %cst_51 : f32 to vector<16x64xf32>
    %144 = arith.maximumf %142, %143 : vector<16x64xf32>
    %cst_52 = arith.constant dense<0.000000e+00> : vector<16x32xf32>
    %145 = tpu.matmul %144, %4, %cst_52 {dimension_numbers = #tpu.dot_dimension_numbers<[1], [0], [0], [1], [0, 0, 1, 1], [], []>} : vector<16x64xf32>, vector<64x32xf32>, vector<16x32xf32> -> vector<16x32xf32>
    %146 = vector.broadcast %12 : vector<1x32xf32> to vector<16x32xf32>
    %147 = arith.addf %145, %146 : vector<16x32xf32>
    %148 = arith.addf %139, %147 : vector<16x32xf32>
    %cst_53 = arith.constant dense<0.000000e+00> : vector<16xf32>
    %149 = vector.multi_reduction <add>, %148, %cst_53 [1] : vector<16x32xf32> to vector<16xf32>
    %150 = vector.shape_cast %149 : vector<16xf32> to vector<16x1xf32>
    %cst_54 = arith.constant 3.200000e+01 : f32
    %151 = vector.broadcast %cst_54 : f32 to vector<16x1xf32>
    %152 = arith.divf %150, %151 : vector<16x1xf32>
    %153 = vector.broadcast %152 : vector<16x1xf32> to vector<16x32xf32>
    %154 = arith.subf %148, %153 : vector<16x32xf32>
    %155 = arith.mulf %154, %154 : vector<16x32xf32>
    %cst_55 = arith.constant dense<0.000000e+00> : vector<16xf32>
    %156 = vector.multi_reduction <add>, %155, %cst_55 [1] : vector<16x32xf32> to vector<16xf32>
    %157 = vector.shape_cast %156 : vector<16xf32> to vector<16x1xf32>
    %cst_56 = arith.constant 3.200000e+01 : f32
    %158 = vector.broadcast %cst_56 : f32 to vector<16x1xf32>
    %159 = arith.divf %157, %158 : vector<16x1xf32>
    %160 = vector.broadcast %152 : vector<16x1xf32> to vector<16x32xf32>
    %161 = arith.subf %148, %160 : vector<16x32xf32>
    %cst_57 = arith.constant 9.99999974E-6 : f32
    %162 = vector.broadcast %cst_57 : f32 to vector<16x1xf32>
    %163 = arith.addf %159, %162 : vector<16x1xf32>
    %164 = math.rsqrt %163 : vector<16x1xf32>
    %165 = vector.broadcast %164 : vector<16x1xf32> to vector<16x32xf32>
    %166 = arith.mulf %161, %165 : vector<16x32xf32>
    %167 = vector.broadcast %9 : vector<1x32xf32> to vector<16x32xf32>
    %168 = arith.mulf %166, %167 : vector<16x32xf32>
    %169 = vector.broadcast %10 : vector<1x32xf32> to vector<16x32xf32>
    %170 = arith.addf %168, %169 : vector<16x32xf32>
    %cst_58 = arith.constant dense<0.000000e+00> : vector<16x8xf32>
    %171 = tpu.matmul %170, %1, %cst_58 {dimension_numbers = #tpu.dot_dimension_numbers<[1], [0], [0], [1], [0, 0, 1, 1], [], []>} : vector<16x32xf32>, vector<32x8xf32>, vector<16x8xf32> -> vector<16x8xf32>
    %172 = vector.broadcast %13 : vector<1x8xf32> to vector<16x8xf32>
    %173 = arith.addf %171, %172 : vector<16x8xf32>
    %c0_59 = arith.constant 0 : index
    %c0_60 = arith.constant 0 : index
    %174 = vector.load %arg4[%c0_59, %c0_60] : memref<16x8xf32, #tpu.memory_space<vmem>>, vector<16x8xf32>
    tpu.vector_store %arg4[%c0_59, %c0_60], %173 {strides = array<i32>} : memref<16x8xf32, #tpu.memory_space<vmem>>, vector<16x8xf32>,
    return
  }
}

</mosaic_0001>

<llo_original>
// kernel: tpu_custom_call.1
$region0: #{tpu_custom_call.1}
  #allocation0 [shape = 'u32[]', space=smem, size = 0x4, offset = 0x4, fixed_abs, tag = 'smem constant byte address 0x4 - core index']
  #allocation1 [shape = 'u32[144,128]{1,0:T(1,128)}', space=vmem, size = 0x12000, scoped, tag = 'internal scratch']
  %s0 = inlined_call_operand.hbm [shape: f32[16,32], index: 0, kind: input, shape index: {}]
  %s1 = inlined_call_operand.hbm [shape: f32[16,32], index: 1, kind: input, shape index: {}]
  %s2 = inlined_call_operand.hbm [shape: f32[128,128], index: 2, kind: input, shape index: {}]
  %s3 = inlined_call_operand.hbm [shape: f32[32,128], index: 3, kind: input, shape index: {}]
  %s4 = inlined_call_operand.vmem [shape: f32[16,8], index: 4, kind: output, shape index: {}]
  %s5 = sld [smem:[#allocation0]]
  $region42: #{tpu_custom_call.1} parent=0
    _
  %s7 = ssub.s32 1, %s5
  %s8 = scalar_select 0, %s7, %s5
  $region1: #{tpu_custom_call.1} parent=0
    #allocation2 [shape = 'u8[8192]{0}', space=vmem, size = 0x2000, scoped, tag = 'input window, operand 0, single buffered']
    #allocation3 [shape = 's32[1]{0}', space=sflag, size = 0x4, scoped, tag = 'scoped memory for tpu_custom_call.1']
    #allocation4 [shape = 'u8[8192]{0}', space=vmem, size = 0x2000, scoped, tag = 'input window, operand 1, single buffered']
    #allocation5 [shape = 's32[1]{0}', space=sflag, size = 0x4, scoped, tag = 'scoped memory for tpu_custom_call.1']
    #allocation6 [shape = 'u8[65536]{0}', space=vmem, size = 0x10000, scoped, tag = 'input window, operand 2, single buffered']
    #allocation7 [shape = 'u8[16384]{0}', space=vmem, size = 0x4000, scoped, tag = 'input window, operand 3, single buffered']
    #allocation8 [shape = 's32[1]{0}', space=sflag, size = 0x4, scoped, tag = 'scoped memory for tpu_custom_call.1']
    %9 = vsyncpa [#allocation3], 0
    %10 = vsyncpa [#allocation5], 0
    %11 = vsyncpa [#allocation8], 0
    // Predicated region
    $region2: #{tpu_custom_call.1} parent=1 // pred_check
      _
    $region3: #{tpu_custom_call.1} parent=1 // pred_check_branch
      %13 = sbr.rel (0) target = $region5
    $region4: #{tpu_custom_call.1} parent=1 // pred_region
      %s15 = ssub.s32 256, 256
      %16 = vsyncadd [#allocation3], %s15
      %s17 = sshll.u32 [#allocation2], 4
      %s18 = int_to_ptr.vmem [resolvable:$true] %s17
      %23 = dma.hbm_to_vmem [thread:$0]  %s0, 256, %s18, [#allocation3], 128, 128, 8
    $region5: #{tpu_custom_call.1} parent=1 // pred_fallthru
      _
    // Predicated region
    $region6: #{tpu_custom_call.1} parent=1 // pred_check
      _
    $region7: #{tpu_custom_call.1} parent=1 // pred_check_branch
      %25 = sbr.rel (0) target = $region9
    $region8: #{tpu_custom_call.1} parent=1 // pred_region
      %s27 = ssub.s32 256, 256
      %28 = vsyncadd [#allocation5], %s27
      %s29 = sshll.u32 [#allocation4], 4
      %s30 = int_to_ptr.vmem [resolvable:$true] %s29
      %35 = dma.hbm_to_vmem [thread:$0]  %s1, 256, %s30, [#allocation5], 128, 128, 8
    $region9: #{tpu_custom_call.1} parent=1 // pred_fallthru
      _
    // Predicated region
    $region10: #{tpu_custom_call.1} parent=1 // pred_check
      _
    $region11: #{tpu_custom_call.1} parent=1 // pred_check_branch
      %37 = sbr.rel (0) target = $region13
    $region12: #{tpu_custom_call.1} parent=1 // pred_region
      %s39 = ssub.s32 2048, 2048
      %40 = vsyncadd [#allocation5], %s39
      %s41 = sshll.u32 [#allocation6], 4
      %s42 = int_to_ptr.vmem [resolvable:$true] %s41
      %47 = dma.hbm_to_vmem [thread:$0]  %s2, 2048, %s42, [#allocation5], 128, 128, 8
    $region13: #{tpu_custom_call.1} parent=1 // pred_fallthru
      _
    // Predicated region
    $region14: #{tpu_custom_call.1} parent=1 // pred_check
      _
    $region15: #{tpu_custom_call.1} parent=1 // pred_check_branch
      %49 = sbr.rel (0) target = $region17
    $region16: #{tpu_custom_call.1} parent=1 // pred_region
      %s51 = ssub.s32 512, 512
      %52 = vsyncadd [#allocation8], %s51
      %s53 = sshll.u32 [#allocation7], 4
      %s54 = int_to_ptr.vmem [resolvable:$true] %s53
      %59 = dma.hbm_to_vmem [thread:$0]  %s3, 512, %s54, [#allocation8], 128, 128, 8
    $region17: #{tpu_custom_call.1} parent=1 // pred_fallthru
      _
    // Predicated region
    $region18: #{tpu_custom_call.1} parent=1 // pred_check
      _
    $region19: #{tpu_custom_call.1} parent=1 // pred_check_branch
      %61 = sbr.rel (0) target = $region21
    $region20: #{tpu_custom_call.1} parent=1 // pred_region
      %62 = dma.done [#allocation3], 256
    $region21: #{tpu_custom_call.1} parent=1 // pred_fallthru
      _
    // Predicated region
    $region22: #{tpu_custom_call.1} parent=1 // pred_check
      _
    $region23: #{tpu_custom_call.1} parent=1 // pred_check_branch
      %64 = sbr.rel (0) target = $region25
    $region24: #{tpu_custom_call.1} parent=1 // pred_region
      %65 = dma.done [#allocation5], 256
    $region25: #{tpu_custom_call.1} parent=1 // pred_fallthru
      _
    // Predicated region
    $region26: #{tpu_custom_call.1} parent=1 // pred_check
      _
    $region27: #{tpu_custom_call.1} parent=1 // pred_check_branch
      %67 = sbr.rel (0) target = $region29
    $region28: #{tpu_custom_call.1} parent=1 // pred_region
      %68 = dma.done [#allocation5], 2048
    $region29: #{tpu_custom_call.1} parent=1 // pred_fallthru
      _
    // Predicated region
    $region30: #{tpu_custom_call.1} parent=1 // pred_check
      _
    $region31: #{tpu_custom_call.1} parent=1 // pred_check_branch
      %70 = sbr.rel (0) target = $region33
    $region32: #{tpu_custom_call.1} parent=1 // pred_region
      %71 = dma.done [#allocation8], 512
    $region33: #{tpu_custom_call.1} parent=1 // pred_fallthru
      _
    %v72 = vld [vmem:[#allocation6] sm:$0xff]
    %v73 = vld [vmem:[#allocation6 + $0x8] sm:$0xff]
    %v74 = vld [vmem:[#allocation6 + $0x10] sm:$0xff]
    %v75 = vld [vmem:[#allocation6 + $0x18] sm:$0xff]
    %v76 = vld [vmem:[#allocation6 + $0x20] sm:$0xff]
    %v77 = vld [vmem:[#allocation6 + $0x28] sm:$0xff]
    %v78 = vld [vmem:[#allocation6 + $0x30] sm:$0xff]
    %v79 = vld [vmem:[#allocation6 + $0x38] sm:$0xff]
    %v80 = vld [vmem:[#allocation6 + $0x40] sm:$0xff]
    %v81 = vld [vmem:[#allocation6 + $0x48] sm:$0xff]
    %v82 = vld [vmem:[#allocation6 + $0x50] sm:$0xff]
    %v83 = vld [vmem:[#allocation6 + $0x58] sm:$0xff]
    %v84 = vld [vmem:[#allocation6 + $0x60] sm:$0xff]
    %v85 = vld [vmem:[#allocation6 + $0x68] sm:$0xff]
    %v86 = vld [vmem:[#allocation6 + $0x70] sm:$0xff]
    %v87 = vld [vmem:[#allocation6 + $0x78] sm:$0xff]
    %v88 = vld [vmem:[#allocation7] sm:$0x1]
    %v89 = vld [vmem:[#allocation7 + $0x1] sm:$0x1]
    %v90 = vld [vmem:[#allocation7 + $0x2] sm:$0x1]
    %v91 = vld [vmem:[#allocation7 + $0x3] sm:$0x1]
    %v92 = vld [vmem:[#allocation7 + $0x4] sm:$0x1]
    %v93 = vld [vmem:[#allocation7 + $0x5] sm:$0x1]
    %v94 = vld [vmem:[#allocation7 + $0x6] sm:$0x1]
    %v95 = vld [vmem:[#allocation7 + $0x7] sm:$0x1]
    %v96 = vld [vmem:[#allocation7 + $0x8] sm:$0x1]
    %v97 = vld [vmem:[#allocation7 + $0x10] sm:$0xff]
    %v98 = vld [vmem:[#allocation7 + $0x18] sm:$0xff]
    %v99 = vld [vmem:[#allocation2] sm:$0xff]
    %v100 = vld [vmem:[#allocation2 + $0x8] sm:$0xff]
    %v101 = vld [vmem:[#allocation4] sm:$0xff]
    %v102 = vld [vmem:[#allocation4 + $0x8] sm:$0xff]
    %v103 = vadd.f32 %v99, %v101
    %v104 = vadd.f32 %v100, %v102
    %v105 = vlaneseq
    %v106 = vshrl.u32 %v105, 7
    %v107 = vsub.s32 0, %v106
    %v108 = vrot.slane %v88, %v107
    %vm109 = vcmask 261120
    %v111 = vsel %vm109, %v103, 0
    %v114 = vsel %vm109, %v104, 0
    %116 = vmatprep.subr.mxu0 0.0
    %117 = vmatpush1.msra.mxu0 %v72
    %118 = vmatprep.subr.mxu0 0.0
    %119 = vmatpush1.msra.mxu0 %v73
    %120 = vmatprep.subr.mxu0 0.0
    %121 = vmatpush1.msra.mxu0 %v74
    %122 = vmatprep.subr.mxu0 0.0
    %123 = vmatpush1.msra.mxu0 %v75
    %124 = vmatprep.subr.mxu0 0.0
    %125 = vmatpush1.msra.mxu0 0.0
    %126 = vmatprep.subr.mxu0 0.0
    %127 = vmatpush1.msra.mxu0 0.0
    %128 = vmatprep.subr.mxu0 0.0
    %129 = vmatpush1.msra.mxu0 0.0
    %130 = vmatprep.subr.mxu0 0.0
    %131 = vmatpush1.msra.mxu0 0.0
    %132 = vmatprep.subr.mxu0 0.0
    %133 = vmatpush1.msra.mxu0 0.0
    %134 = vmatprep.subr.mxu0 0.0
    %135 = vmatpush1.msra.mxu0 0.0
    %136 = vmatprep.subr.mxu0 0.0
    %137 = vmatpush1.msra.mxu0 0.0
    %138 = vmatprep.subr.mxu0 0.0
    %139 = vmatpush1.msra.mxu0 0.0
    %140 = vmatprep.subr.mxu0 0.0
    %141 = vmatpush1.msra.mxu0 0.0
    %142 = vmatprep.subr.mxu0 0.0
    %143 = vmatpush1.msra.mxu0 0.0
    %144 = vmatprep.subr.mxu0 0.0
    %145 = vmatpush1.msra.mxu0 0.0
    %146 = vmatprep.subr.mxu0 0.0
    %147 = vmatpush1.msra.mxu0 0.0
    %148 = vmatprep.subr.mxu0 0.0
    %149 = vmatpush1.msra.mxu0 0.0
    %150 = vmatprep.subr.mxu0 0.0
    %151 = vmatpush1.msra.mxu0 0.0
    %152 = vmatprep.subr.mxu0 0.0
    %153 = vmatpush1.msra.mxu0 0.0
    %154 = vmatprep.subr.mxu0 0.0
    %155 = vmatpush1.msra.mxu0 0.0
    %156 = vmatprep.subr.mxu0 0.0
    %157 = vmatpush1.msra.mxu0 0.0
    %158 = vmatprep.subr.mxu0 0.0
    %159 = vmatpush1.msra.mxu0 0.0
    %160 = vmatprep.subr.mxu0 0.0
    %161 = vmatpush1.msra.mxu0 0.0
    %162 = vmatprep.subr.mxu0 0.0
    %163 = vmatpush1.msra.mxu0 0.0
    %164 = vmatprep.subr.mxu0 0.0
    %165 = vmatpush1.msra.mxu0 0.0
    %166 = vmatprep.subr.mxu0 0.0
    %167 = vmatpush1.msra.mxu0 0.0
    %168 = vmatprep.subr.mxu0 0.0
    %169 = vmatpush1.msra.mxu0 0.0
    %170 = vmatprep.subr.mxu0 0.0
    %171 = vmatpush1.msra.mxu0 0.0
    %172 = vmatprep.subr.mxu0 0.0
    %173 = vmatpush1.msra.mxu0 0.0
    %174 = vmatprep.subr.mxu0 0.0
    %175 = vmatpush1.msra.mxu0 0.0
    %176 = vmatprep.subr.mxu0 0.0
    %177 = vmatpush1.msra.mxu0 0.0
    %178 = vmatprep.subr.mxu0 0.0
    %179 = vmatpush1.msra.mxu0 0.0
    %180 = vmatprep.mubr.f32.mxu0 0.0
    %181 = vmatmul.mubr.f32.gmra.mrb[0].mxu0 %v111
    %v182 = vpop.f32.mrb[0].mxu0
    %v183 = vadd.f32 %v108, %v182
    %v184 = vpop.f32.mrb[0].mxu0
    %185 = vmatprep.mubr.f32.mxu0 0.0
    %186 = vmatmul.mubr.f32.gmra.mrb[0].mxu0 %v114
    %v187 = vpop.f32.mrb[0].mxu0
    %v188 = vadd.f32 %v108, %v187
    %v189 = vpop.f32.mrb[0].mxu0
    %190 = vdwg.mxu0
    %193 = vrot.lane.b32.xlu0 %v183, 96
    %v194 = vpop.permute.xlu0 %193
    %195 = vrot.lane.b32.xlu0 %v188, 96
    %v196 = vpop.permute.xlu0 %195
    %vm197 = vcmask 64512
    %v198 = vsel %vm197, %v183, 0
    %v200 = vsel %vm197, %v188, 0
    %v202 = vsel %vm197, %v194, 0
    %v204 = vsel %vm197, %v196, 0
    %206 = vmatprep.subr.mxu0 0.0
    %207 = vmatpush1.xpose.msra.mxu0 %v202
    %208 = vmatprep.subr.mxu0 0.0
    %209 = vmatpush1.xpose.msra.mxu0 %v204
    %210 = vmatprep.subr.mxu0 0.0
    %211 = vmatpush1.xpose.msra.mxu0 0.0
    %212 = vmatprep.subr.mxu0 0.0
    %213 = vmatpush1.xpose.msra.mxu0 0.0
    %214 = vmatprep.subr.mxu0 0.0
    %215 = vmatpush1.xpose.msra.mxu0 0.0
    %216 = vmatprep.subr.mxu0 0.0
    %217 = vmatpush1.xpose.msra.mxu0 0.0
    %218 = vmatprep.subr.mxu0 0.0
    %219 = vmatpush1.xpose.msra.mxu0 0.0
    %220 = vmatprep.subr.mxu0 0.0
    %221 = vmatpush1.xpose.msra.mxu0 0.0
    %222 = vmatprep.subr.mxu0 0.0
    %223 = vmatpush1.xpose.msra.mxu0 0.0
    %224 = vmatprep.subr.mxu0 0.0
    %225 = vmatpush1.xpose.msra.mxu0 0.0
    %226 = vmatprep.subr.mxu0 0.0
    %227 = vmatpush1.xpose.msra.mxu0 0.0
    %228 = vmatprep.subr.mxu0 0.0
    %229 = vmatpush1.xpose.msra.mxu0 0.0
    %230 = vmatprep.subr.mxu0 0.0
    %231 = vmatpush1.xpose.msra.mxu0 0.0
    %232 = vmatprep.subr.mxu0 0.0
    %233 = vmatpush1.xpose.msra.mxu0 0.0
    %234 = vmatprep.subr.mxu0 0.0
    %235 = vmatpush1.xpose.msra.mxu0 0.0
    %236 = vmatprep.subr.mxu0 0.0
    %237 = vmatpush1.xpose.msra.mxu0 0.0
    %238 = vmatprep.subr.mxu0 0.0
    %239 = vmatpush1.xpose.msra.mxu0 0.0
    %240 = vmatprep.subr.mxu0 0.0
    %241 = vmatpush1.xpose.msra.mxu0 0.0
    %242 = vmatprep.subr.mxu0 0.0
    %243 = vmatpush1.xpose.msra.mxu0 0.0
    %244 = vmatprep.subr.mxu0 0.0
    %245 = vmatpush1.xpose.msra.mxu0 0.0
    %246 = vmatprep.subr.mxu0 0.0
    %247 = vmatpush1.xpose.msra.mxu0 0.0
    %248 = vmatprep.subr.mxu0 0.0
    %249 = vmatpush1.xpose.msra.mxu0 0.0
    %250 = vmatprep.subr.mxu0 0.0
    %251 = vmatpush1.xpose.msra.mxu0 0.0
    %252 = vmatprep.subr.mxu0 0.0
    %253 = vmatpush1.xpose.msra.mxu0 0.0
    %254 = vmatprep.subr.mxu0 0.0
    %255 = vmatpush1.xpose.msra.mxu0 0.0
    %256 = vmatprep.subr.mxu0 0.0
    %257 = vmatpush1.xpose.msra.mxu0 0.0
    %258 = vmatprep.subr.mxu0 0.0
    %259 = vmatpush1.xpose.msra.mxu0 0.0
    %260 = vmatprep.subr.mxu0 0.0
    %261 = vmatpush1.xpose.msra.mxu0 0.0
    %262 = vmatprep.subr.mxu0 0.0
    %263 = vmatpush1.xpose.msra.mxu0 0.0
    %264 = vmatprep.subr.mxu0 0.0
    %265 = vmatpush1.xpose.msra.mxu0 0.0
    %266 = vmatprep.subr.mxu0 0.0
    %267 = vmatpush1.xpose.msra.mxu0 0.0
    %268 = vmatprep.subr.mxu0 0.0
    %269 = vmatpush1.xpose.msra.mxu0 0.0
    %270 = vmatprep.mubr.f32.mxu0 0.0
    %271 = vmatmul.mubr.f32.gmra.mrb[0].mxu0 %v198
    %v272 = vpop.f32.mrb[0].mxu0
    %v273 = vadd.f32 %v97, %v272
    %v274 = vpop.f32.mrb[0].mxu0
    %275 = vmatprep.mubr.f32.mxu0 0.0
    %276 = vmatmul.mubr.f32.gmra.mrb[0].mxu0 %v200
    %v277 = vpop.f32.mrb[0].mxu0
    %v278 = vadd.f32 %v98, %v277
    %v279 = vpop.f32.mrb[0].mxu0
    %280 = vdwg.mxu0
    %vm281 = vcmask 130048
    %v282 = vsel %vm281, %v273, -inf
    %283 = vmax.xlane.f32.xlu0 %v282
    %v284 = vpop.xlane.xlu0 %283
    %v285 = vsel %vm281, %v278, -inf
    %286 = vmax.xlane.f32.xlu0 %v285
    %v287 = vpop.xlane.xlu0 %286
    %v288 = vsub.f32 %v273, %v284
    %v289 = vsub.f32 %v278, %v287
    %v290 = vmul.f32 %v288, 1.442695
    %v291 = vpow.pop %v290
    %v292 = vmul.f32 %v289, 1.442695
    %v293 = vpow.pop %v292
    %v294 = vsel %vm281, %v291, 0.0
    %295 = vadd.xlane.f32.xlu0 %v294
    %v296 = vpop.xlane.xlu0 %295
    %v297 = vsel %vm281, %v293, 0.0
    %298 = vadd.xlane.f32.xlu0 %v297
    %v299 = vpop.xlane.xlu0 %298
    %v300 = vrcp.pop %v296
    %v301 = vrcp.pop %v299
    %v302 = vmul.f32 %v296, %v300
    %v303 = vmul.f32 %v299, %v301
    %v304 = vsub.f32 2.0, %v302
    %v305 = vsub.f32 2.0, %v303
    %v306 = vmul.f32 %v300, %v304
    %v307 = vmul.f32 %v301, %v305
    %308 = vrot.lane.b32.xlu0 %v183, 64
    %v309 = vpop.permute.xlu0 %308
    %310 = vrot.lane.b32.xlu0 %v188, 64
    %v311 = vpop.permute.xlu0 %310
    %v315 = vsel %vm281, %v291, 0
    %v318 = vsel %vm281, %v293, 0
    %320 = vmatprep.subr.mxu0 0.0
    %321 = vmatpush1.msra.mxu0 %v309
    %322 = vmatprep.subr.mxu0 0.0
    %323 = vmatpush1.msra.mxu0 %v311
    %324 = vmatprep.subr.mxu0 0.0
    %325 = vmatpush1.msra.mxu0 0.0
    %326 = vmatprep.subr.mxu0 0.0
    %327 = vmatpush1.msra.mxu0 0.0
    %328 = vmatprep.subr.mxu0 0.0
    %329 = vmatpush1.msra.mxu0 0.0
    %330 = vmatprep.subr.mxu0 0.0
    %331 = vmatpush1.msra.mxu0 0.0
    %332 = vmatprep.subr.mxu0 0.0
    %333 = vmatpush1.msra.mxu0 0.0
    %334 = vmatprep.subr.mxu0 0.0
    %335 = vmatpush1.msra.mxu0 0.0
    %336 = vmatprep.subr.mxu0 0.0
    %337 = vmatpush1.msra.mxu0 0.0
    %338 = vmatprep.subr.mxu0 0.0
    %339 = vmatpush1.msra.mxu0 0.0
    %340 = vmatprep.subr.mxu0 0.0
    %341 = vmatpush1.msra.mxu0 0.0
    %342 = vmatprep.subr.mxu0 0.0
    %343 = vmatpush1.msra.mxu0 0.0
    %344 = vmatprep.subr.mxu0 0.0
    %345 = vmatpush1.msra.mxu0 0.0
    %346 = vmatprep.subr.mxu0 0.0
    %347 = vmatpush1.msra.mxu0 0.0
    %348 = vmatprep.subr.mxu0 0.0
    %349 = vmatpush1.msra.mxu0 0.0
    %350 = vmatprep.subr.mxu0 0.0
    %351 = vmatpush1.msra.mxu0 0.0
    %352 = vmatprep.subr.mxu0 0.0
    %353 = vmatpush1.msra.mxu0 0.0
    %354 = vmatprep.subr.mxu0 0.0
    %355 = vmatpush1.msra.mxu0 0.0
    %356 = vmatprep.subr.mxu0 0.0
    %357 = vmatpush1.msra.mxu0 0.0
    %358 = vmatprep.subr.mxu0 0.0
    %359 = vmatpush1.msra.mxu0 0.0
    %360 = vmatprep.subr.mxu0 0.0
    %361 = vmatpush1.msra.mxu0 0.0
    %362 = vmatprep.subr.mxu0 0.0
    %363 = vmatpush1.msra.mxu0 0.0
    %364 = vmatprep.subr.mxu0 0.0
    %365 = vmatpush1.msra.mxu0 0.0
    %366 = vmatprep.subr.mxu0 0.0
    %367 = vmatpush1.msra.mxu0 0.0
    %368 = vmatprep.subr.mxu0 0.0
    %369 = vmatpush1.msra.mxu0 0.0
    %370 = vmatprep.subr.mxu0 0.0
    %371 = vmatpush1.msra.mxu0 0.0
    %372 = vmatprep.subr.mxu0 0.0
    %373 = vmatpush1.msra.mxu0 0.0
    %374 = vmatprep.subr.mxu0 0.0
    %375 = vmatpush1.msra.mxu0 0.0
    %376 = vmatprep.subr.mxu0 0.0
    %377 = vmatpush1.msra.mxu0 0.0
    %378 = vmatprep.subr.mxu0 0.0
    %379 = vmatpush1.msra.mxu0 0.0
    %380 = vmatprep.subr.mxu0 0.0
    %381 = vmatpush1.msra.mxu0 0.0
    %382 = vmatprep.subr.mxu0 0.0
    %383 = vmatpush1.msra.mxu0 0.0
    %384 = vmatprep.mubr.f32.mxu0 0.0
    %385 = vmatmul.mubr.f32.gmra.mrb[0].mxu0 %v315
    %v386 = vpop.f32.mrb[0].mxu0
    %v387 = vadd.f32 0.0, %v386
    %v388 = vpop.f32.mrb[0].mxu0
    %389 = vmatprep.mubr.f32.mxu0 0.0
    %390 = vmatmul.mubr.f32.gmra.mrb[0].mxu0 %v318
    %v391 = vpop.f32.mrb[0].mxu0
    %v392 = vadd.f32 0.0, %v391
    %v393 = vpop.f32.mrb[0].mxu0
    %394 = vdwg.mxu0
    %v395 = vmul.f32 %v387, %v306
    %v396 = vmul.f32 %v392, %v307
    %397 = vrot.lane.b32.xlu0 %v183, 120
    %v398 = vpop.permute.xlu0 %397
    %399 = vrot.lane.b32.xlu0 %v188, 120
    %v400 = vpop.permute.xlu0 %399
    %401 = vrot.lane.b32.xlu0 %v183, 88
    %v402 = vpop.permute.xlu0 %401
    %403 = vrot.lane.b32.xlu0 %v188, 88
    %v404 = vpop.permute.xlu0 %403
    %v405 = vsel %vm197, %v398, 0
    %v407 = vsel %vm197, %v400, 0
    %v409 = vsel %vm197, %v402, 0
    %v411 = vsel %vm197, %v404, 0
    %413 = vmatprep.subr.mxu0 0.0
    %414 = vmatpush1.xpose.msra.mxu0 %v409
    %415 = vmatprep.subr.mxu0 0.0
    %416 = vmatpush1.xpose.msra.mxu0 %v411
    %417 = vmatprep.subr.mxu0 0.0
    %418 = vmatpush1.xpose.msra.mxu0 0.0
    %419 = vmatprep.subr.mxu0 0.0
    %420 = vmatpush1.xpose.msra.mxu0 0.0
    %421 = vmatprep.subr.mxu0 0.0
    %422 = vmatpush1.xpose.msra.mxu0 0.0
    %423 = vmatprep.subr.mxu0 0.0
    %424 = vmatpush1.xpose.msra.mxu0 0.0
    %425 = vmatprep.subr.mxu0 0.0
    %426 = vmatpush1.xpose.msra.mxu0 0.0
    %427 = vmatprep.subr.mxu0 0.0
    %428 = vmatpush1.xpose.msra.mxu0 0.0
    %429 = vmatprep.subr.mxu0 0.0
    %430 = vmatpush1.xpose.msra.mxu0 0.0
    %431 = vmatprep.subr.mxu0 0.0
    %432 = vmatpush1.xpose.msra.mxu0 0.0
    %433 = vmatprep.subr.mxu0 0.0
    %434 = vmatpush1.xpose.msra.mxu0 0.0
    %435 = vmatprep.subr.mxu0 0.0
    %436 = vmatpush1.xpose.msra.mxu0 0.0
    %437 = vmatprep.subr.mxu0 0.0
    %438 = vmatpush1.xpose.msra.mxu0 0.0
    %439 = vmatprep.subr.mxu0 0.0
    %440 = vmatpush1.xpose.msra.mxu0 0.0
    %441 = vmatprep.subr.mxu0 0.0
    %442 = vmatpush1.xpose.msra.mxu0 0.0
    %443 = vmatprep.subr.mxu0 0.0
    %444 = vmatpush1.xpose.msra.mxu0 0.0
    %445 = vmatprep.subr.mxu0 0.0
    %446 = vmatpush1.xpose.msra.mxu0 0.0
    %447 = vmatprep.subr.mxu0 0.0
    %448 = vmatpush1.xpose.msra.mxu0 0.0
    %449 = vmatprep.subr.mxu0 0.0
    %450 = vmatpush1.xpose.msra.mxu0 0.0
    %451 = vmatprep.subr.mxu0 0.0
    %452 = vmatpush1.xpose.msra.mxu0 0.0
    %453 = vmatprep.subr.mxu0 0.0
    %454 = vmatpush1.xpose.msra.mxu0 0.0
    %455 = vmatprep.subr.mxu0 0.0
    %456 = vmatpush1.xpose.msra.mxu0 0.0
    %457 = vmatprep.subr.mxu0 0.0
    %458 = vmatpush1.xpose.msra.mxu0 0.0
    %459 = vmatprep.subr.mxu0 0.0
    %460 = vmatpush1.xpose.msra.mxu0 0.0
    %461 = vmatprep.subr.mxu0 0.0
    %462 = vmatpush1.xpose.msra.mxu0 0.0
    %463 = vmatprep.subr.mxu0 0.0
    %464 = vmatpush1.xpose.msra.mxu0 0.0
    %465 = vmatprep.subr.mxu0 0.0
    %466 = vmatpush1.xpose.msra.mxu0 0.0
    %467 = vmatprep.subr.mxu0 0.0
    %468 = vmatpush1.xpose.msra.mxu0 0.0
    %469 = vmatprep.subr.mxu0 0.0
    %470 = vmatpush1.xpose.msra.mxu0 0.0
    %471 = vmatprep.subr.mxu0 0.0
    %472 = vmatpush1.xpose.msra.mxu0 0.0
    %473 = vmatprep.subr.mxu0 0.0
    %474 = vmatpush1.xpose.msra.mxu0 0.0
    %475 = vmatprep.subr.mxu0 0.0
    %476 = vmatpush1.xpose.msra.mxu0 0.0
    %477 = vmatprep.mubr.f32.mxu0 0.0
    %478 = vmatmul.mubr.f32.gmra.mrb[0].mxu0 %v405
    %v479 = vpop.f32.mrb[0].mxu0
    %v480 = vadd.f32 %v97, %v479
    %v481 = vpop.f32.mrb[0].mxu0
    %482 = vmatprep.mubr.f32.mxu0 0.0
    %483 = vmatmul.mubr.f32.gmra.mrb[0].mxu0 %v407
    %v484 = vpop.f32.mrb[0].mxu0
    %v485 = vadd.f32 %v98, %v484
    %v486 = vpop.f32.mrb[0].mxu0
    %487 = vdwg.mxu0
    %v488 = vsel %vm281, %v480, -inf
    %489 = vmax.xlane.f32.xlu0 %v488
    %v490 = vpop.xlane.xlu0 %489
    %v491 = vsel %vm281, %v485, -inf
    %492 = vmax.xlane.f32.xlu0 %v491
    %v493 = vpop.xlane.xlu0 %492
    %v494 = vsub.f32 %v480, %v490
    %v495 = vsub.f32 %v485, %v493
    %v496 = vmul.f32 %v494, 1.442695
    %v497 = vpow.pop %v496
    %v498 = vmul.f32 %v495, 1.442695
    %v499 = vpow.pop %v498
    %v500 = vsel %vm281, %v497, 0.0
    %501 = vadd.xlane.f32.xlu0 %v500
    %v502 = vpop.xlane.xlu0 %501
    %v503 = vsel %vm281, %v499, 0.0
    %504 = vadd.xlane.f32.xlu0 %v503
    %v505 = vpop.xlane.xlu0 %504
    %v506 = vrcp.pop %v502
    %v507 = vrcp.pop %v505
    %v508 = vmul.f32 %v502, %v506
    %v509 = vmul.f32 %v505, %v507
    %v510 = vsub.f32 2.0, %v508
    %v511 = vsub.f32 2.0, %v509
    %v512 = vmul.f32 %v506, %v510
    %v513 = vmul.f32 %v507, %v511
    %514 = vrot.lane.b32.xlu0 %v183, 56
    %v515 = vpop.permute.xlu0 %514
    %516 = vrot.lane.b32.xlu0 %v188, 56
    %v517 = vpop.permute.xlu0 %516
    %v521 = vsel %vm281, %v497, 0
    %v524 = vsel %vm281, %v499, 0
    %526 = vmatprep.subr.mxu0 0.0
    %527 = vmatpush1.msra.mxu0 %v515
    %528 = vmatprep.subr.mxu0 0.0
    %529 = vmatpush1.msra.mxu0 %v517
    %530 = vmatprep.subr.mxu0 0.0
    %531 = vmatpush1.msra.mxu0 0.0
    %532 = vmatprep.subr.mxu0 0.0
    %533 = vmatpush1.msra.mxu0 0.0
    %534 = vmatprep.subr.mxu0 0.0
    %535 = vmatpush1.msra.mxu0 0.0
    %536 = vmatprep.subr.mxu0 0.0
    %537 = vmatpush1.msra.mxu0 0.0
    %538 = vmatprep.subr.mxu0 0.0
    %539 = vmatpush1.msra.mxu0 0.0
    %540 = vmatprep.subr.mxu0 0.0
    %541 = vmatpush1.msra.mxu0 0.0
    %542 = vmatprep.subr.mxu0 0.0
    %543 = vmatpush1.msra.mxu0 0.0
    %544 = vmatprep.subr.mxu0 0.0
    %545 = vmatpush1.msra.mxu0 0.0
    %546 = vmatprep.subr.mxu0 0.0
    %547 = vmatpush1.msra.mxu0 0.0
    %548 = vmatprep.subr.mxu0 0.0
    %549 = vmatpush1.msra.mxu0 0.0
    %550 = vmatprep.subr.mxu0 0.0
    %551 = vmatpush1.msra.mxu0 0.0
    %552 = vmatprep.subr.mxu0 0.0
    %553 = vmatpush1.msra.mxu0 0.0
    %554 = vmatprep.subr.mxu0 0.0
    %555 = vmatpush1.msra.mxu0 0.0
    %556 = vmatprep.subr.mxu0 0.0
    %557 = vmatpush1.msra.mxu0 0.0
    %558 = vmatprep.subr.mxu0 0.0
    %559 = vmatpush1.msra.mxu0 0.0
    %560 = vmatprep.subr.mxu0 0.0
    %561 = vmatpush1.msra.mxu0 0.0
    %562 = vmatprep.subr.mxu0 0.0
    %563 = vmatpush1.msra.mxu0 0.0
    %564 = vmatprep.subr.mxu0 0.0
    %565 = vmatpush1.msra.mxu0 0.0
    %566 = vmatprep.subr.mxu0 0.0
    %567 = vmatpush1.msra.mxu0 0.0
    %568 = vmatprep.subr.mxu0 0.0
    %569 = vmatpush1.msra.mxu0 0.0
    %570 = vmatprep.subr.mxu0 0.0
    %571 = vmatpush1.msra.mxu0 0.0
    %572 = vmatprep.subr.mxu0 0.0
    %573 = vmatpush1.msra.mxu0 0.0
    %574 = vmatprep.subr.mxu0 0.0
    %575 = vmatpush1.msra.mxu0 0.0
    %576 = vmatprep.subr.mxu0 0.0
    %577 = vmatpush1.msra.mxu0 0.0
    %578 = vmatprep.subr.mxu0 0.0
    %579 = vmatpush1.msra.mxu0 0.0
    %580 = vmatprep.subr.mxu0 0.0
    %581 = vmatpush1.msra.mxu0 0.0
    %582 = vmatprep.subr.mxu0 0.0
    %583 = vmatpush1.msra.mxu0 0.0
    %584 = vmatprep.subr.mxu0 0.0
    %585 = vmatpush1.msra.mxu0 0.0
    %586 = vmatprep.subr.mxu0 0.0
    %587 = vmatpush1.msra.mxu0 0.0
    %588 = vmatprep.subr.mxu0 0.0
    %589 = vmatpush1.msra.mxu0 0.0
    %590 = vmatprep.mubr.f32.mxu0 0.0
    %591 = vmatmul.mubr.f32.gmra.mrb[0].mxu0 %v521
    %v592 = vpop.f32.mrb[0].mxu0
    %v593 = vadd.f32 0.0, %v592
    %v594 = vpop.f32.mrb[0].mxu0
    %595 = vmatprep.mubr.f32.mxu0 0.0
    %596 = vmatmul.mubr.f32.gmra.mrb[0].mxu0 %v524
    %v597 = vpop.f32.mrb[0].mxu0
    %v598 = vadd.f32 0.0, %v597
    %v599 = vpop.f32.mrb[0].mxu0
    %600 = vdwg.mxu0
    %v601 = vmul.f32 %v593, %v512
    %v602 = vmul.f32 %v598, %v513
    %v604 = vsel %vm197, %v601, 0
    %v607 = vsel %vm197, %v602, 0
    %609 = vmatprep.subr.mxu0 0.0
    %610 = vmatpush1.msra.mxu0 %v77
    %611 = vmatprep.subr.mxu0 0.0
    %612 = vmatpush1.msra.mxu0 0.0
    %613 = vmatprep.subr.mxu0 0.0
    %614 = vmatpush1.msra.mxu0 0.0
    %615 = vmatprep.subr.mxu0 0.0
    %616 = vmatpush1.msra.mxu0 0.0
    %617 = vmatprep.subr.mxu0 0.0
    %618 = vmatpush1.msra.mxu0 0.0
    %619 = vmatprep.subr.mxu0 0.0
    %620 = vmatpush1.msra.mxu0 0.0
    %621 = vmatprep.subr.mxu0 0.0
    %622 = vmatpush1.msra.mxu0 0.0
    %623 = vmatprep.subr.mxu0 0.0
    %624 = vmatpush1.msra.mxu0 0.0
    %625 = vmatprep.subr.mxu0 0.0
    %626 = vmatpush1.msra.mxu0 0.0
    %627 = vmatprep.subr.mxu0 0.0
    %628 = vmatpush1.msra.mxu0 0.0
    %629 = vmatprep.subr.mxu0 0.0
    %630 = vmatpush1.msra.mxu0 0.0
    %631 = vmatprep.subr.mxu0 0.0
    %632 = vmatpush1.msra.mxu0 0.0
    %633 = vmatprep.subr.mxu0 0.0
    %634 = vmatpush1.msra.mxu0 0.0
    %635 = vmatprep.subr.mxu0 0.0
    %636 = vmatpush1.msra.mxu0 0.0
    %637 = vmatprep.subr.mxu0 0.0
    %638 = vmatpush1.msra.mxu0 0.0
    %639 = vmatprep.subr.mxu0 0.0
    %640 = vmatpush1.msra.mxu0 0.0
    %641 = vmatprep.subr.mxu0 0.0
    %642 = vmatpush1.msra.mxu0 0.0
    %643 = vmatprep.subr.mxu0 0.0
    %644 = vmatpush1.msra.mxu0 0.0
    %645 = vmatprep.subr.mxu0 0.0
    %646 = vmatpush1.msra.mxu0 0.0
    %647 = vmatprep.subr.mxu0 0.0
    %648 = vmatpush1.msra.mxu0 0.0
    %649 = vmatprep.subr.mxu0 0.0
    %650 = vmatpush1.msra.mxu0 0.0
    %651 = vmatprep.subr.mxu0 0.0
    %652 = vmatpush1.msra.mxu0 0.0
    %653 = vmatprep.subr.mxu0 0.0
    %654 = vmatpush1.msra.mxu0 0.0
    %655 = vmatprep.subr.mxu0 0.0
    %656 = vmatpush1.msra.mxu0 0.0
    %657 = vmatprep.subr.mxu0 0.0
    %658 = vmatpush1.msra.mxu0 0.0
    %659 = vmatprep.subr.mxu0 0.0
    %660 = vmatpush1.msra.mxu0 0.0
    %661 = vmatprep.subr.mxu0 0.0
    %662 = vmatpush1.msra.mxu0 0.0
    %663 = vmatprep.subr.mxu0 0.0
    %664 = vmatpush1.msra.mxu0 0.0
    %665 = vmatprep.subr.mxu0 0.0
    %666 = vmatpush1.msra.mxu0 0.0
    %667 = vmatprep.subr.mxu0 0.0
    %668 = vmatpush1.msra.mxu0 0.0
    %669 = vmatprep.subr.mxu0 0.0
    %670 = vmatpush1.msra.mxu0 0.0
    %671 = vmatprep.subr.mxu0 0.0
    %672 = vmatpush1.msra.mxu0 0.0
    %673 = vmatprep.mubr.f32.mxu0 0.0
    %674 = vmatmul.mubr.f32.gmra.mrb[0].mxu0 %v604
    %v675 = vpop.f32.mrb[0].mxu0
    %v676 = vadd.f32 0.0, %v675
    %v677 = vpop.f32.mrb[0].mxu0
    %678 = vmatprep.mubr.f32.mxu0 0.0
    %679 = vmatmul.mubr.f32.gmra.mrb[0].mxu0 %v607
    %v680 = vpop.f32.mrb[0].mxu0
    %v681 = vadd.f32 0.0, %v680
    %v682 = vpop.f32.mrb[0].mxu0
    %683 = vdwg.mxu0
    %v685 = vsel %vm197, %v395, 0
    %v688 = vsel %vm197, %v396, 0
    %690 = vmatprep.subr.mxu0 0.0
    %691 = vmatpush1.msra.mxu0 %v76
    %692 = vmatprep.subr.mxu0 0.0
    %693 = vmatpush1.msra.mxu0 0.0
    %694 = vmatprep.subr.mxu0 0.0
    %695 = vmatpush1.msra.mxu0 0.0
    %696 = vmatprep.subr.mxu0 0.0
    %697 = vmatpush1.msra.mxu0 0.0
    %698 = vmatprep.subr.mxu0 0.0
    %699 = vmatpush1.msra.mxu0 0.0
    %700 = vmatprep.subr.mxu0 0.0
    %701 = vmatpush1.msra.mxu0 0.0
    %702 = vmatprep.subr.mxu0 0.0
    %703 = vmatpush1.msra.mxu0 0.0
    %704 = vmatprep.subr.mxu0 0.0
    %705 = vmatpush1.msra.mxu0 0.0
    %706 = vmatprep.subr.mxu0 0.0
    %707 = vmatpush1.msra.mxu0 0.0
    %708 = vmatprep.subr.mxu0 0.0
    %709 = vmatpush1.msra.mxu0 0.0
    %710 = vmatprep.subr.mxu0 0.0
    %711 = vmatpush1.msra.mxu0 0.0
    %712 = vmatprep.subr.mxu0 0.0
    %713 = vmatpush1.msra.mxu0 0.0
    %714 = vmatprep.subr.mxu0 0.0
    %715 = vmatpush1.msra.mxu0 0.0
    %716 = vmatprep.subr.mxu0 0.0
    %717 = vmatpush1.msra.mxu0 0.0
    %718 = vmatprep.subr.mxu0 0.0
    %719 = vmatpush1.msra.mxu0 0.0
    %720 = vmatprep.subr.mxu0 0.0
    %721 = vmatpush1.msra.mxu0 0.0
    %722 = vmatprep.subr.mxu0 0.0
    %723 = vmatpush1.msra.mxu0 0.0
    %724 = vmatprep.subr.mxu0 0.0
    %725 = vmatpush1.msra.mxu0 0.0
    %726 = vmatprep.subr.mxu0 0.0
    %727 = vmatpush1.msra.mxu0 0.0
    %728 = vmatprep.subr.mxu0 0.0
    %729 = vmatpush1.msra.mxu0 0.0
    %730 = vmatprep.subr.mxu0 0.0
    %731 = vmatpush1.msra.mxu0 0.0
    %732 = vmatprep.subr.mxu0 0.0
    %733 = vmatpush1.msra.mxu0 0.0
    %734 = vmatprep.subr.mxu0 0.0
    %735 = vmatpush1.msra.mxu0 0.0
    %736 = vmatprep.subr.mxu0 0.0
    %737 = vmatpush1.msra.mxu0 0.0
    %738 = vmatprep.subr.mxu0 0.0
    %739 = vmatpush1.msra.mxu0 0.0
    %740 = vmatprep.subr.mxu0 0.0
    %741 = vmatpush1.msra.mxu0 0.0
    %742 = vmatprep.subr.mxu0 0.0
    %743 = vmatpush1.msra.mxu0 0.0
    %744 = vmatprep.subr.mxu0 0.0
    %745 = vmatpush1.msra.mxu0 0.0
    %746 = vmatprep.subr.mxu0 0.0
    %747 = vmatpush1.msra.mxu0 0.0
    %748 = vmatprep.subr.mxu0 0.0
    %749 = vmatpush1.msra.mxu0 0.0
    %750 = vmatprep.subr.mxu0 0.0
    %751 = vmatpush1.msra.mxu0 0.0
    %752 = vmatprep.subr.mxu0 0.0
    %753 = vmatpush1.msra.mxu0 0.0
    %754 = vmatprep.mubr.f32.mxu0 0.0
    %755 = vmatmul.mubr.f32.gmra.mrb[0].mxu0 %v685
    %v756 = vpop.f32.mrb[0].mxu0
    %v757 = vadd.f32 %v676, %v756
    %v758 = vpop.f32.mrb[0].mxu0
    %759 = vmatprep.mubr.f32.mxu0 0.0
    %760 = vmatmul.mubr.f32.gmra.mrb[0].mxu0 %v688
    %v761 = vpop.f32.mrb[0].mxu0
    %v762 = vadd.f32 %v681, %v761
    %v763 = vpop.f32.mrb[0].mxu0
    %764 = vdwg.mxu0
    %765 = vrot.lane.b32.xlu0 %v183, 112
    %v766 = vpop.permute.xlu0 %765
    %767 = vrot.lane.b32.xlu0 %v188, 112
    %v768 = vpop.permute.xlu0 %767
    %769 = vrot.lane.b32.xlu0 %v183, 80
    %v770 = vpop.permute.xlu0 %769
    %771 = vrot.lane.b32.xlu0 %v188, 80
    %v772 = vpop.permute.xlu0 %771
    %v773 = vsel %vm197, %v766, 0
    %v775 = vsel %vm197, %v768, 0
    %v777 = vsel %vm197, %v770, 0
    %v779 = vsel %vm197, %v772, 0
    %781 = vmatprep.subr.mxu0 0.0
    %782 = vmatpush1.xpose.msra.mxu0 %v777
    %783 = vmatprep.subr.mxu0 0.0
    %784 = vmatpush1.xpose.msra.mxu0 %v779
    %785 = vmatprep.subr.mxu0 0.0
    %786 = vmatpush1.xpose.msra.mxu0 0.0
    %787 = vmatprep.subr.mxu0 0.0
    %788 = vmatpush1.xpose.msra.mxu0 0.0
    %789 = vmatprep.subr.mxu0 0.0
    %790 = vmatpush1.xpose.msra.mxu0 0.0
    %791 = vmatprep.subr.mxu0 0.0
    %792 = vmatpush1.xpose.msra.mxu0 0.0
    %793 = vmatprep.subr.mxu0 0.0
    %794 = vmatpush1.xpose.msra.mxu0 0.0
    %795 = vmatprep.subr.mxu0 0.0
    %796 = vmatpush1.xpose.msra.mxu0 0.0
    %797 = vmatprep.subr.mxu0 0.0
    %798 = vmatpush1.xpose.msra.mxu0 0.0
    %799 = vmatprep.subr.mxu0 0.0
    %800 = vmatpush1.xpose.msra.mxu0 0.0
    %801 = vmatprep.subr.mxu0 0.0
    %802 = vmatpush1.xpose.msra.mxu0 0.0
    %803 = vmatprep.subr.mxu0 0.0
    %804 = vmatpush1.xpose.msra.mxu0 0.0
    %805 = vmatprep.subr.mxu0 0.0
    %806 = vmatpush1.xpose.msra.mxu0 0.0
    %807 = vmatprep.subr.mxu0 0.0
    %808 = vmatpush1.xpose.msra.mxu0 0.0
    %809 = vmatprep.subr.mxu0 0.0
    %810 = vmatpush1.xpose.msra.mxu0 0.0
    %811 = vmatprep.subr.mxu0 0.0
    %812 = vmatpush1.xpose.msra.mxu0 0.0
    %813 = vmatprep.subr.mxu0 0.0
    %814 = vmatpush1.xpose.msra.mxu0 0.0
    %815 = vmatprep.subr.mxu0 0.0
    %816 = vmatpush1.xpose.msra.mxu0 0.0
    %817 = vmatprep.subr.mxu0 0.0
    %818 = vmatpush1.xpose.msra.mxu0 0.0
    %819 = vmatprep.subr.mxu0 0.0
    %820 = vmatpush1.xpose.msra.mxu0 0.0
    %821 = vmatprep.subr.mxu0 0.0
    %822 = vmatpush1.xpose.msra.mxu0 0.0
    %823 = vmatprep.subr.mxu0 0.0
    %824 = vmatpush1.xpose.msra.mxu0 0.0
    %825 = vmatprep.subr.mxu0 0.0
    %826 = vmatpush1.xpose.msra.mxu0 0.0
    %827 = vmatprep.subr.mxu0 0.0
    %828 = vmatpush1.xpose.msra.mxu0 0.0
    %829 = vmatprep.subr.mxu0 0.0
    %830 = vmatpush1.xpose.msra.mxu0 0.0
    %831 = vmatprep.subr.mxu0 0.0
    %832 = vmatpush1.xpose.msra.mxu0 0.0
    %833 = vmatprep.subr.mxu0 0.0
    %834 = vmatpush1.xpose.msra.mxu0 0.0
    %835 = vmatprep.subr.mxu0 0.0
    %836 = vmatpush1.xpose.msra.mxu0 0.0
    %837 = vmatprep.subr.mxu0 0.0
    %838 = vmatpush1.xpose.msra.mxu0 0.0
    %839 = vmatprep.subr.mxu0 0.0
    %840 = vmatpush1.xpose.msra.mxu0 0.0
    %841 = vmatprep.subr.mxu0 0.0
    %842 = vmatpush1.xpose.msra.mxu0 0.0
    %843 = vmatprep.subr.mxu0 0.0
    %844 = vmatpush1.xpose.msra.mxu0 0.0
    %845 = vmatprep.mubr.f32.mxu0 0.0
    %846 = vmatmul.mubr.f32.gmra.mrb[0].mxu0 %v773
    %v847 = vpop.f32.mrb[0].mxu0
    %v848 = vadd.f32 %v97, %v847
    %v849 = vpop.f32.mrb[0].mxu0
    %850 = vmatprep.mubr.f32.mxu0 0.0
    %851 = vmatmul.mubr.f32.gmra.mrb[0].mxu0 %v775
    %v852 = vpop.f32.mrb[0].mxu0
    %v853 = vadd.f32 %v98, %v852
    %v854 = vpop.f32.mrb[0].mxu0
    %855 = vdwg.mxu0
    %v856 = vsel %vm281, %v848, -inf
    %857 = vmax.xlane.f32.xlu0 %v856
    %v858 = vpop.xlane.xlu0 %857
    %v859 = vsel %vm281, %v853, -inf
    %860 = vmax.xlane.f32.xlu0 %v859
    %v861 = vpop.xlane.xlu0 %860
    %v862 = vsub.f32 %v848, %v858
    %v863 = vsub.f32 %v853, %v861
    %v864 = vmul.f32 %v862, 1.442695
    %v865 = vpow.pop %v864
    %v866 = vmul.f32 %v863, 1.442695
    %v867 = vpow.pop %v866
    %v868 = vsel %vm281, %v865, 0.0
    %869 = vadd.xlane.f32.xlu0 %v868
    %v870 = vpop.xlane.xlu0 %869
    %v871 = vsel %vm281, %v867, 0.0
    %872 = vadd.xlane.f32.xlu0 %v871
    %v873 = vpop.xlane.xlu0 %872
    %v874 = vrcp.pop %v870
    %v875 = vrcp.pop %v873
    %v876 = vmul.f32 %v870, %v874
    %v877 = vmul.f32 %v873, %v875
    %v878 = vsub.f32 2.0, %v876
    %v879 = vsub.f32 2.0, %v877
    %v880 = vmul.f32 %v874, %v878
    %v881 = vmul.f32 %v875, %v879
    %882 = vrot.lane.b32.xlu0 %v183, 48
    %v883 = vpop.permute.xlu0 %882
    %884 = vrot.lane.b32.xlu0 %v188, 48
    %v885 = vpop.permute.xlu0 %884
    %v889 = vsel %vm281, %v865, 0
    %v892 = vsel %vm281, %v867, 0
    %894 = vmatprep.subr.mxu0 0.0
    %895 = vmatpush1.msra.mxu0 %v883
    %896 = vmatprep.subr.mxu0 0.0
    %897 = vmatpush1.msra.mxu0 %v885
    %898 = vmatprep.subr.mxu0 0.0
    %899 = vmatpush1.msra.mxu0 0.0
    %900 = vmatprep.subr.mxu0 0.0
    %901 = vmatpush1.msra.mxu0 0.0
    %902 = vmatprep.subr.mxu0 0.0
    %903 = vmatpush1.msra.mxu0 0.0
    %904 = vmatprep.subr.mxu0 0.0
    %905 = vmatpush1.msra.mxu0 0.0
    %906 = vmatprep.subr.mxu0 0.0
    %907 = vmatpush1.msra.mxu0 0.0
    %908 = vmatprep.subr.mxu0 0.0
    %909 = vmatpush1.msra.mxu0 0.0
    %910 = vmatprep.subr.mxu0 0.0
    %911 = vmatpush1.msra.mxu0 0.0
    %912 = vmatprep.subr.mxu0 0.0
    %913 = vmatpush1.msra.mxu0 0.0
    %914 = vmatprep.subr.mxu0 0.0
    %915 = vmatpush1.msra.mxu0 0.0
    %916 = vmatprep.subr.mxu0 0.0
    %917 = vmatpush1.msra.mxu0 0.0
    %918 = vmatprep.subr.mxu0 0.0
    %919 = vmatpush1.msra.mxu0 0.0
    %920 = vmatprep.subr.mxu0 0.0
    %921 = vmatpush1.msra.mxu0 0.0
    %922 = vmatprep.subr.mxu0 0.0
    %923 = vmatpush1.msra.mxu0 0.0
    %924 = vmatprep.subr.mxu0 0.0
    %925 = vmatpush1.msra.mxu0 0.0
    %926 = vmatprep.subr.mxu0 0.0
    %927 = vmatpush1.msra.mxu0 0.0
    %928 = vmatprep.subr.mxu0 0.0
    %929 = vmatpush1.msra.mxu0 0.0
    %930 = vmatprep.subr.mxu0 0.0
    %931 = vmatpush1.msra.mxu0 0.0
    %932 = vmatprep.subr.mxu0 0.0
    %933 = vmatpush1.msra.mxu0 0.0
    %934 = vmatprep.subr.mxu0 0.0
    %935 = vmatpush1.msra.mxu0 0.0
    %936 = vmatprep.subr.mxu0 0.0
    %937 = vmatpush1.msra.mxu0 0.0
    %938 = vmatprep.subr.mxu0 0.0
    %939 = vmatpush1.msra.mxu0 0.0
    %940 = vmatprep.subr.mxu0 0.0
    %941 = vmatpush1.msra.mxu0 0.0
    %942 = vmatprep.subr.mxu0 0.0
    %943 = vmatpush1.msra.mxu0 0.0
    %944 = vmatprep.subr.mxu0 0.0
    %945 = vmatpush1.msra.mxu0 0.0
    %946 = vmatprep.subr.mxu0 0.0
    %947 = vmatpush1.msra.mxu0 0.0
    %948 = vmatprep.subr.mxu0 0.0
    %949 = vmatpush1.msra.mxu0 0.0
    %950 = vmatprep.subr.mxu0 0.0
    %951 = vmatpush1.msra.mxu0 0.0
    %952 = vmatprep.subr.mxu0 0.0
    %953 = vmatpush1.msra.mxu0 0.0
    %954 = vmatprep.subr.mxu0 0.0
    %955 = vmatpush1.msra.mxu0 0.0
    %956 = vmatprep.subr.mxu0 0.0
    %957 = vmatpush1.msra.mxu0 0.0
    %958 = vmatprep.mubr.f32.mxu0 0.0
    %959 = vmatmul.mubr.f32.gmra.mrb[0].mxu0 %v889
    %v960 = vpop.f32.mrb[0].mxu0
    %v961 = vadd.f32 0.0, %v960
    %v962 = vpop.f32.mrb[0].mxu0
    %963 = vmatprep.mubr.f32.mxu0 0.0
    %964 = vmatmul.mubr.f32.gmra.mrb[0].mxu0 %v892
    %v965 = vpop.f32.mrb[0].mxu0
    %v966 = vadd.f32 0.0, %v965
    %v967 = vpop.f32.mrb[0].mxu0
    %968 = vdwg.mxu0
    %v969 = vmul.f32 %v961, %v880
    %v970 = vmul.f32 %v966, %v881
    %v972 = vsel %vm197, %v969, 0
    %v975 = vsel %vm197, %v970, 0
    %977 = vmatprep.subr.mxu0 0.0
    %978 = vmatpush1.msra.mxu0 %v78
    %979 = vmatprep.subr.mxu0 0.0
    %980 = vmatpush1.msra.mxu0 0.0
    %981 = vmatprep.subr.mxu0 0.0
    %982 = vmatpush1.msra.mxu0 0.0
    %983 = vmatprep.subr.mxu0 0.0
    %984 = vmatpush1.msra.mxu0 0.0
    %985 = vmatprep.subr.mxu0 0.0
    %986 = vmatpush1.msra.mxu0 0.0
    %987 = vmatprep.subr.mxu0 0.0
    %988 = vmatpush1.msra.mxu0 0.0
    %989 = vmatprep.subr.mxu0 0.0
    %990 = vmatpush1.msra.mxu0 0.0
    %991 = vmatprep.subr.mxu0 0.0
    %992 = vmatpush1.msra.mxu0 0.0
    %993 = vmatprep.subr.mxu0 0.0
    %994 = vmatpush1.msra.mxu0 0.0
    %995 = vmatprep.subr.mxu0 0.0
    %996 = vmatpush1.msra.mxu0 0.0
    %997 = vmatprep.subr.mxu0 0.0
    %998 = vmatpush1.msra.mxu0 0.0
    %999 = vmatprep.subr.mxu0 0.0
    %1000 = vmatpush1.msra.mxu0 0.0
    %1001 = vmatprep.subr.mxu0 0.0
    %1002 = vmatpush1.msra.mxu0 0.0
    %1003 = vmatprep.subr.mxu0 0.0
    %1004 = vmatpush1.msra.mxu0 0.0
    %1005 = vmatprep.subr.mxu0 0.0
    %1006 = vmatpush1.msra.mxu0 0.0
    %1007 = vmatprep.subr.mxu0 0.0
    %1008 = vmatpush1.msra.mxu0 0.0
    %1009 = vmatprep.subr.mxu0 0.0
    %1010 = vmatpush1.msra.mxu0 0.0
    %1011 = vmatprep.subr.mxu0 0.0
    %1012 = vmatpush1.msra.mxu0 0.0
    %1013 = vmatprep.subr.mxu0 0.0
    %1014 = vmatpush1.msra.mxu0 0.0
    %1015 = vmatprep.subr.mxu0 0.0
    %1016 = vmatpush1.msra.mxu0 0.0
    %1017 = vmatprep.subr.mxu0 0.0
    %1018 = vmatpush1.msra.mxu0 0.0
    %1019 = vmatprep.subr.mxu0 0.0
    %1020 = vmatpush1.msra.mxu0 0.0
    %1021 = vmatprep.subr.mxu0 0.0
    %1022 = vmatpush1.msra.mxu0 0.0
    %1023 = vmatprep.subr.mxu0 0.0
    %1024 = vmatpush1.msra.mxu0 0.0
    %1025 = vmatprep.subr.mxu0 0.0
    %1026 = vmatpush1.msra.mxu0 0.0
    %1027 = vmatprep.subr.mxu0 0.0
    %1028 = vmatpush1.msra.mxu0 0.0
    %1029 = vmatprep.subr.mxu0 0.0
    %1030 = vmatpush1.msra.mxu0 0.0
    %1031 = vmatprep.subr.mxu0 0.0
    %1032 = vmatpush1.msra.mxu0 0.0
    %1033 = vmatprep.subr.mxu0 0.0
    %1034 = vmatpush1.msra.mxu0 0.0
    %1035 = vmatprep.subr.mxu0 0.0
    %1036 = vmatpush1.msra.mxu0 0.0
    %1037 = vmatprep.subr.mxu0 0.0
    %1038 = vmatpush1.msra.mxu0 0.0
    %1039 = vmatprep.subr.mxu0 0.0
    %1040 = vmatpush1.msra.mxu0 0.0
    %1041 = vmatprep.mubr.f32.mxu0 0.0
    %1042 = vmatmul.mubr.f32.gmra.mrb[0].mxu0 %v972
    %v1043 = vpop.f32.mrb[0].mxu0
    %v1044 = vadd.f32 0.0, %v1043
    %v1045 = vpop.f32.mrb[0].mxu0
    %1046 = vmatprep.mubr.f32.mxu0 0.0
    %1047 = vmatmul.mubr.f32.gmra.mrb[0].mxu0 %v975
    %v1048 = vpop.f32.mrb[0].mxu0
    %v1049 = vadd.f32 0.0, %v1048
    %v1050 = vpop.f32.mrb[0].mxu0
    %1051 = vdwg.mxu0
    %v1052 = vadd.f32 %v757, %v1044
    %v1053 = vadd.f32 %v762, %v1049
    %1054 = vrot.lane.b32.xlu0 %v183, 104
    %v1055 = vpop.permute.xlu0 %1054
    %1056 = vrot.lane.b32.xlu0 %v188, 104
    %v1057 = vpop.permute.xlu0 %1056
    %1058 = vrot.lane.b32.xlu0 %v183, 72
    %v1059 = vpop.permute.xlu0 %1058
    %1060 = vrot.lane.b32.xlu0 %v188, 72
    %v1061 = vpop.permute.xlu0 %1060
    %v1062 = vsel %vm197, %v1055, 0
    %v1064 = vsel %vm197, %v1057, 0
    %v1066 = vsel %vm197, %v1059, 0
    %v1068 = vsel %vm197, %v1061, 0
    %1070 = vmatprep.subr.mxu0 0.0
    %1071 = vmatpush1.xpose.msra.mxu0 %v1066
    %1072 = vmatprep.subr.mxu0 0.0
    %1073 = vmatpush1.xpose.msra.mxu0 %v1068
    %1074 = vmatprep.subr.mxu0 0.0
    %1075 = vmatpush1.xpose.msra.mxu0 0.0
    %1076 = vmatprep.subr.mxu0 0.0
    %1077 = vmatpush1.xpose.msra.mxu0 0.0
    %1078 = vmatprep.subr.mxu0 0.0
    %1079 = vmatpush1.xpose.msra.mxu0 0.0
    %1080 = vmatprep.subr.mxu0 0.0
    %1081 = vmatpush1.xpose.msra.mxu0 0.0
    %1082 = vmatprep.subr.mxu0 0.0
    %1083 = vmatpush1.xpose.msra.mxu0 0.0
    %1084 = vmatprep.subr.mxu0 0.0
    %1085 = vmatpush1.xpose.msra.mxu0 0.0
    %1086 = vmatprep.subr.mxu0 0.0
    %1087 = vmatpush1.xpose.msra.mxu0 0.0
    %1088 = vmatprep.subr.mxu0 0.0
    %1089 = vmatpush1.xpose.msra.mxu0 0.0
    %1090 = vmatprep.subr.mxu0 0.0
    %1091 = vmatpush1.xpose.msra.mxu0 0.0
    %1092 = vmatprep.subr.mxu0 0.0
    %1093 = vmatpush1.xpose.msra.mxu0 0.0
    %1094 = vmatprep.subr.mxu0 0.0
    %1095 = vmatpush1.xpose.msra.mxu0 0.0
    %1096 = vmatprep.subr.mxu0 0.0
    %1097 = vmatpush1.xpose.msra.mxu0 0.0
    %1098 = vmatprep.subr.mxu0 0.0
    %1099 = vmatpush1.xpose.msra.mxu0 0.0
    %1100 = vmatprep.subr.mxu0 0.0
    %1101 = vmatpush1.xpose.msra.mxu0 0.0
    %1102 = vmatprep.subr.mxu0 0.0
    %1103 = vmatpush1.xpose.msra.mxu0 0.0
    %1104 = vmatprep.subr.mxu0 0.0
    %1105 = vmatpush1.xpose.msra.mxu0 0.0
    %1106 = vmatprep.subr.mxu0 0.0
    %1107 = vmatpush1.xpose.msra.mxu0 0.0
    %1108 = vmatprep.subr.mxu0 0.0
    %1109 = vmatpush1.xpose.msra.mxu0 0.0
    %1110 = vmatprep.subr.mxu0 0.0
    %1111 = vmatpush1.xpose.msra.mxu0 0.0
    %1112 = vmatprep.subr.mxu0 0.0
    %1113 = vmatpush1.xpose.msra.mxu0 0.0
    %1114 = vmatprep.subr.mxu0 0.0
    %1115 = vmatpush1.xpose.msra.mxu0 0.0
    %1116 = vmatprep.subr.mxu0 0.0
    %1117 = vmatpush1.xpose.msra.mxu0 0.0
    %1118 = vmatprep.subr.mxu0 0.0
    %1119 = vmatpush1.xpose.msra.mxu0 0.0
    %1120 = vmatprep.subr.mxu0 0.0
    %1121 = vmatpush1.xpose.msra.mxu0 0.0
    %1122 = vmatprep.subr.mxu0 0.0
    %1123 = vmatpush1.xpose.msra.mxu0 0.0
    %1124 = vmatprep.subr.mxu0 0.0
    %1125 = vmatpush1.xpose.msra.mxu0 0.0
    %1126 = vmatprep.subr.mxu0 0.0
    %1127 = vmatpush1.xpose.msra.mxu0 0.0
    %1128 = vmatprep.subr.mxu0 0.0
    %1129 = vmatpush1.xpose.msra.mxu0 0.0
    %1130 = vmatprep.subr.mxu0 0.0
    %1131 = vmatpush1.xpose.msra.mxu0 0.0
    %1132 = vmatprep.subr.mxu0 0.0
    %1133 = vmatpush1.xpose.msra.mxu0 0.0
    %1134 = vmatprep.mubr.f32.mxu0 0.0
    %1135 = vmatmul.mubr.f32.gmra.mrb[0].mxu0 %v1062
    %v1136 = vpop.f32.mrb[0].mxu0
    %v1137 = vadd.f32 %v97, %v1136
    %v1138 = vpop.f32.mrb[0].mxu0
    %1139 = vmatprep.mubr.f32.mxu0 0.0
    %1140 = vmatmul.mubr.f32.gmra.mrb[0].mxu0 %v1064
    %v1141 = vpop.f32.mrb[0].mxu0
    %v1142 = vadd.f32 %v98, %v1141
    %v1143 = vpop.f32.mrb[0].mxu0
    %1144 = vdwg.mxu0
    %v1145 = vsel %vm281, %v1137, -inf
    %1146 = vmax.xlane.f32.xlu0 %v1145
    %v1147 = vpop.xlane.xlu0 %1146
    %v1148 = vsel %vm281, %v1142, -inf
    %1149 = vmax.xlane.f32.xlu0 %v1148
    %v1150 = vpop.xlane.xlu0 %1149
    %v1151 = vsub.f32 %v1137, %v1147
    %v1152 = vsub.f32 %v1142, %v1150
    %v1153 = vmul.f32 %v1151, 1.442695
    %v1154 = vpow.pop %v1153
    %v1155 = vmul.f32 %v1152, 1.442695
    %v1156 = vpow.pop %v1155
    %v1157 = vsel %vm281, %v1154, 0.0
    %1158 = vadd.xlane.f32.xlu0 %v1157
    %v1159 = vpop.xlane.xlu0 %1158
    %v1160 = vsel %vm281, %v1156, 0.0
    %1161 = vadd.xlane.f32.xlu0 %v1160
    %v1162 = vpop.xlane.xlu0 %1161
    %v1163 = vrcp.pop %v1159
    %v1164 = vrcp.pop %v1162
    %v1165 = vmul.f32 %v1159, %v1163
    %v1166 = vmul.f32 %v1162, %v1164
    %v1167 = vsub.f32 2.0, %v1165
    %v1168 = vsub.f32 2.0, %v1166
    %v1169 = vmul.f32 %v1163, %v1167
    %v1170 = vmul.f32 %v1164, %v1168
    %1171 = vrot.lane.b32.xlu0 %v183, 40
    %v1172 = vpop.permute.xlu0 %1171
    %1173 = vrot.lane.b32.xlu0 %v188, 40
    %v1174 = vpop.permute.xlu0 %1173
    %v1178 = vsel %vm281, %v1154, 0
    %v1181 = vsel %vm281, %v1156, 0
    %1183 = vmatprep.subr.mxu0 0.0
    %1184 = vmatpush1.msra.mxu0 %v1172
    %1185 = vmatprep.subr.mxu0 0.0
    %1186 = vmatpush1.msra.mxu0 %v1174
    %1187 = vmatprep.subr.mxu0 0.0
    %1188 = vmatpush1.msra.mxu0 0.0
    %1189 = vmatprep.subr.mxu0 0.0
    %1190 = vmatpush1.msra.mxu0 0.0
    %1191 = vmatprep.subr.mxu0 0.0
    %1192 = vmatpush1.msra.mxu0 0.0
    %1193 = vmatprep.subr.mxu0 0.0
    %1194 = vmatpush1.msra.mxu0 0.0
    %1195 = vmatprep.subr.mxu0 0.0
    %1196 = vmatpush1.msra.mxu0 0.0
    %1197 = vmatprep.subr.mxu0 0.0
    %1198 = vmatpush1.msra.mxu0 0.0
    %1199 = vmatprep.subr.mxu0 0.0
    %1200 = vmatpush1.msra.mxu0 0.0
    %1201 = vmatprep.subr.mxu0 0.0
    %1202 = vmatpush1.msra.mxu0 0.0
    %1203 = vmatprep.subr.mxu0 0.0
    %1204 = vmatpush1.msra.mxu0 0.0
    %1205 = vmatprep.subr.mxu0 0.0
    %1206 = vmatpush1.msra.mxu0 0.0
    %1207 = vmatprep.subr.mxu0 0.0
    %1208 = vmatpush1.msra.mxu0 0.0
    %1209 = vmatprep.subr.mxu0 0.0
    %1210 = vmatpush1.msra.mxu0 0.0
    %1211 = vmatprep.subr.mxu0 0.0
    %1212 = vmatpush1.msra.mxu0 0.0
    %1213 = vmatprep.subr.mxu0 0.0
    %1214 = vmatpush1.msra.mxu0 0.0
    %1215 = vmatprep.subr.mxu0 0.0
    %1216 = vmatpush1.msra.mxu0 0.0
    %1217 = vmatprep.subr.mxu0 0.0
    %1218 = vmatpush1.msra.mxu0 0.0
    %1219 = vmatprep.subr.mxu0 0.0
    %1220 = vmatpush1.msra.mxu0 0.0
    %1221 = vmatprep.subr.mxu0 0.0
    %1222 = vmatpush1.msra.mxu0 0.0
    %1223 = vmatprep.subr.mxu0 0.0
    %1224 = vmatpush1.msra.mxu0 0.0
    %1225 = vmatprep.subr.mxu0 0.0
    %1226 = vmatpush1.msra.mxu0 0.0
    %1227 = vmatprep.subr.mxu0 0.0
    %1228 = vmatpush1.msra.mxu0 0.0
    %1229 = vmatprep.subr.mxu0 0.0
    %1230 = vmatpush1.msra.mxu0 0.0
    %1231 = vmatprep.subr.mxu0 0.0
    %1232 = vmatpush1.msra.mxu0 0.0
    %1233 = vmatprep.subr.mxu0 0.0
    %1234 = vmatpush1.msra.mxu0 0.0
    %1235 = vmatprep.subr.mxu0 0.0
    %1236 = vmatpush1.msra.mxu0 0.0
    %1237 = vmatprep.subr.mxu0 0.0
    %1238 = vmatpush1.msra.mxu0 0.0
    %1239 = vmatprep.subr.mxu0 0.0
    %1240 = vmatpush1.msra.mxu0 0.0
    %1241 = vmatprep.subr.mxu0 0.0
    %1242 = vmatpush1.msra.mxu0 0.0
    %1243 = vmatprep.subr.mxu0 0.0
    %1244 = vmatpush1.msra.mxu0 0.0
    %1245 = vmatprep.subr.mxu0 0.0
    %1246 = vmatpush1.msra.mxu0 0.0
    %1247 = vmatprep.mubr.f32.mxu0 0.0
    %1248 = vmatmul.mubr.f32.gmra.mrb[0].mxu0 %v1178
    %v1249 = vpop.f32.mrb[0].mxu0
    %v1250 = vadd.f32 0.0, %v1249
    %v1251 = vpop.f32.mrb[0].mxu0
    %1252 = vmatprep.mubr.f32.mxu0 0.0
    %1253 = vmatmul.mubr.f32.gmra.mrb[0].mxu0 %v1181
    %v1254 = vpop.f32.mrb[0].mxu0
    %v1255 = vadd.f32 0.0, %v1254
    %v1256 = vpop.f32.mrb[0].mxu0
    %1257 = vdwg.mxu0
    %v1258 = vmul.f32 %v1250, %v1169
    %v1259 = vmul.f32 %v1255, %v1170
    %v1261 = vsel %vm197, %v1258, 0
    %v1264 = vsel %vm197, %v1259, 0
    %1266 = vmatprep.subr.mxu0 0.0
    %1267 = vmatpush1.msra.mxu0 %v79
    %1268 = vmatprep.subr.mxu0 0.0
    %1269 = vmatpush1.msra.mxu0 0.0
    %1270 = vmatprep.subr.mxu0 0.0
    %1271 = vmatpush1.msra.mxu0 0.0
    %1272 = vmatprep.subr.mxu0 0.0
    %1273 = vmatpush1.msra.mxu0 0.0
    %1274 = vmatprep.subr.mxu0 0.0
    %1275 = vmatpush1.msra.mxu0 0.0
    %1276 = vmatprep.subr.mxu0 0.0
    %1277 = vmatpush1.msra.mxu0 0.0
    %1278 = vmatprep.subr.mxu0 0.0
    %1279 = vmatpush1.msra.mxu0 0.0
    %1280 = vmatprep.subr.mxu0 0.0
    %1281 = vmatpush1.msra.mxu0 0.0
    %1282 = vmatprep.subr.mxu0 0.0
    %1283 = vmatpush1.msra.mxu0 0.0
    %1284 = vmatprep.subr.mxu0 0.0
    %1285 = vmatpush1.msra.mxu0 0.0
    %1286 = vmatprep.subr.mxu0 0.0
    %1287 = vmatpush1.msra.mxu0 0.0
    %1288 = vmatprep.subr.mxu0 0.0
    %1289 = vmatpush1.msra.mxu0 0.0
    %1290 = vmatprep.subr.mxu0 0.0
    %1291 = vmatpush1.msra.mxu0 0.0
    %1292 = vmatprep.subr.mxu0 0.0
    %1293 = vmatpush1.msra.mxu0 0.0
    %1294 = vmatprep.subr.mxu0 0.0
    %1295 = vmatpush1.msra.mxu0 0.0
    %1296 = vmatprep.subr.mxu0 0.0
    %1297 = vmatpush1.msra.mxu0 0.0
    %1298 = vmatprep.subr.mxu0 0.0
    %1299 = vmatpush1.msra.mxu0 0.0
    %1300 = vmatprep.subr.mxu0 0.0
    %1301 = vmatpush1.msra.mxu0 0.0
    %1302 = vmatprep.subr.mxu0 0.0
    %1303 = vmatpush1.msra.mxu0 0.0
    %1304 = vmatprep.subr.mxu0 0.0
    %1305 = vmatpush1.msra.mxu0 0.0
    %1306 = vmatprep.subr.mxu0 0.0
    %1307 = vmatpush1.msra.mxu0 0.0
    %1308 = vmatprep.subr.mxu0 0.0
    %1309 = vmatpush1.msra.mxu0 0.0
    %1310 = vmatprep.subr.mxu0 0.0
    %1311 = vmatpush1.msra.mxu0 0.0
    %1312 = vmatprep.subr.mxu0 0.0
    %1313 = vmatpush1.msra.mxu0 0.0
    %1314 = vmatprep.subr.mxu0 0.0
    %1315 = vmatpush1.msra.mxu0 0.0
    %1316 = vmatprep.subr.mxu0 0.0
    %1317 = vmatpush1.msra.mxu0 0.0
    %1318 = vmatprep.subr.mxu0 0.0
    %1319 = vmatpush1.msra.mxu0 0.0
    %1320 = vmatprep.subr.mxu0 0.0
    %1321 = vmatpush1.msra.mxu0 0.0
    %1322 = vmatprep.subr.mxu0 0.0
    %1323 = vmatpush1.msra.mxu0 0.0
    %1324 = vmatprep.subr.mxu0 0.0
    %1325 = vmatpush1.msra.mxu0 0.0
    %1326 = vmatprep.subr.mxu0 0.0
    %1327 = vmatpush1.msra.mxu0 0.0
    %1328 = vmatprep.subr.mxu0 0.0
    %1329 = vmatpush1.msra.mxu0 0.0
    %1330 = vmatprep.mubr.f32.mxu0 0.0
    %1331 = vmatmul.mubr.f32.gmra.mrb[0].mxu0 %v1261
    %v1332 = vpop.f32.mrb[0].mxu0
    %v1333 = vadd.f32 0.0, %v1332
    %v1334 = vpop.f32.mrb[0].mxu0
    %1335 = vmatprep.mubr.f32.mxu0 0.0
    %1336 = vmatmul.mubr.f32.gmra.mrb[0].mxu0 %v1264
    %v1337 = vpop.f32.mrb[0].mxu0
    %v1338 = vadd.f32 0.0, %v1337
    %v1339 = vpop.f32.mrb[0].mxu0
    %1340 = vdwg.mxu0
    %v1341 = vadd.f32 %v1052, %v1333
    %v1342 = vadd.f32 %v1053, %v1338
    %v1343 = vlaneseq
    %v1344 = vshrl.u32 %v1343, 7
    %v1345 = vsub.s32 0, %v1344
    %v1346 = vrot.slane %v89, %v1345
    %v1347 = vadd.f32 %v1341, %v1346
    %v1348 = vadd.f32 %v1342, %v1346
    %v1349 = vadd.f32 %v103, %v1347
    %v1350 = vadd.f32 %v104, %v1348
    %v1351 = vsel %vm109, %v1349, 0.0
    %1352 = vadd.xlane.f32.xlu0 %v1351
    %v1353 = vpop.xlane.xlu0 %1352
    %v1354 = vsel %vm109, %v1350, 0.0
    %1355 = vadd.xlane.f32.xlu0 %v1354
    %v1356 = vpop.xlane.xlu0 %1355
    %v1357 = vrcp.pop 32.0
    %v1358 = vmul.f32 %v1353, %v1357
    %v1359 = vmul.f32 %v1356, %v1357
    %v1360 = vsub.f32 %v1349, %v1358
    %v1361 = vsub.f32 %v1350, %v1359
    %v1362 = vmul.f32 %v1360, %v1360
    %v1363 = vmul.f32 %v1361, %v1361
    %v1364 = vsel %vm109, %v1362, 0.0
    %1365 = vadd.xlane.f32.xlu0 %v1364
    %v1366 = vpop.xlane.xlu0 %1365
    %v1367 = vsel %vm109, %v1363, 0.0
    %1368 = vadd.xlane.f32.xlu0 %v1367
    %v1369 = vpop.xlane.xlu0 %1368
    %v1370 = vmul.f32 %v1366, %v1357
    %v1371 = vmul.f32 %v1369, %v1357
    %v1372 = vadd.f32 %v1370, 1e-05
    %v1373 = vadd.f32 %v1371, 1e-05
    %v1374 = vrsqrt.pop %v1372
    %v1375 = vrsqrt.pop %v1373
    %v1376 = vmul.f32 %v1360, %v1374
    %v1377 = vmul.f32 %v1361, %v1375
    %v1378 = vlaneseq
    %v1379 = vshrl.u32 %v1378, 7
    %v1380 = vsub.s32 0, %v1379
    %v1381 = vrot.slane %v90, %v1380
    %v1382 = vmul.f32 %v1376, %v1381
    %v1383 = vmul.f32 %v1377, %v1381
    %v1384 = vlaneseq
    %v1385 = vshrl.u32 %v1384, 7
    %v1386 = vsub.s32 0, %v1385
    %v1387 = vrot.slane %v91, %v1386
    %v1388 = vadd.f32 %v1382, %v1387
    %v1389 = vadd.f32 %v1383, %v1387
    %v1390 = vlaneseq
    %v1391 = vshrl.u32 %v1390, 7
    %v1392 = vsub.s32 0, %v1391
    %v1393 = vrot.slane %v94, %v1392
    %1398 = vrot.lane.b32.xlu0 %v76, 96
    %v1399 = vpop.permute.xlu0 %1398
    %1400 = vrot.lane.b32.xlu0 %v77, 96
    %v1401 = vpop.permute.xlu0 %1400
    %1402 = vrot.lane.b32.xlu0 %v78, 96
    %v1403 = vpop.permute.xlu0 %1402
    %1404 = vrot.lane.b32.xlu0 %v79, 96
    %v1405 = vpop.permute.xlu0 %1404
    %v1411 = vsel %vm109, %v1388, 0
    %v1414 = vsel %vm109, %v1389, 0
    %1416 = vmatprep.subr.mxu0 0.0
    %1417 = vmatpush1.msra.mxu0 %v1399
    %1418 = vmatprep.subr.mxu0 0.0
    %1419 = vmatpush1.msra.mxu0 %v1401
    %1420 = vmatprep.subr.mxu0 0.0
    %1421 = vmatpush1.msra.mxu0 %v1403
    %1422 = vmatprep.subr.mxu0 0.0
    %1423 = vmatpush1.msra.mxu0 %v1405
    %1424 = vmatprep.subr.mxu0 0.0
    %1425 = vmatpush1.msra.mxu0 0.0
    %1426 = vmatprep.subr.mxu0 0.0
    %1427 = vmatpush1.msra.mxu0 0.0
    %1428 = vmatprep.subr.mxu0 0.0
    %1429 = vmatpush1.msra.mxu0 0.0
    %1430 = vmatprep.subr.mxu0 0.0
    %1431 = vmatpush1.msra.mxu0 0.0
    %1432 = vmatprep.subr.mxu0 0.0
    %1433 = vmatpush1.msra.mxu0 0.0
    %1434 = vmatprep.subr.mxu0 0.0
    %1435 = vmatpush1.msra.mxu0 0.0
    %1436 = vmatprep.subr.mxu0 0.0
    %1437 = vmatpush1.msra.mxu0 0.0
    %1438 = vmatprep.subr.mxu0 0.0
    %1439 = vmatpush1.msra.mxu0 0.0
    %1440 = vmatprep.subr.mxu0 0.0
    %1441 = vmatpush1.msra.mxu0 0.0
    %1442 = vmatprep.subr.mxu0 0.0
    %1443 = vmatpush1.msra.mxu0 0.0
    %1444 = vmatprep.subr.mxu0 0.0
    %1445 = vmatpush1.msra.mxu0 0.0
    %1446 = vmatprep.subr.mxu0 0.0
    %1447 = vmatpush1.msra.mxu0 0.0
    %1448 = vmatprep.subr.mxu0 0.0
    %1449 = vmatpush1.msra.mxu0 0.0
    %1450 = vmatprep.subr.mxu0 0.0
    %1451 = vmatpush1.msra.mxu0 0.0
    %1452 = vmatprep.subr.mxu0 0.0
    %1453 = vmatpush1.msra.mxu0 0.0
    %1454 = vmatprep.subr.mxu0 0.0
    %1455 = vmatpush1.msra.mxu0 0.0
    %1456 = vmatprep.subr.mxu0 0.0
    %1457 = vmatpush1.msra.mxu0 0.0
    %1458 = vmatprep.subr.mxu0 0.0
    %1459 = vmatpush1.msra.mxu0 0.0
    %1460 = vmatprep.subr.mxu0 0.0
    %1461 = vmatpush1.msra.mxu0 0.0
    %1462 = vmatprep.subr.mxu0 0.0
    %1463 = vmatpush1.msra.mxu0 0.0
    %1464 = vmatprep.subr.mxu0 0.0
    %1465 = vmatpush1.msra.mxu0 0.0
    %1466 = vmatprep.subr.mxu0 0.0
    %1467 = vmatpush1.msra.mxu0 0.0
    %1468 = vmatprep.subr.mxu0 0.0
    %1469 = vmatpush1.msra.mxu0 0.0
    %1470 = vmatprep.subr.mxu0 0.0
    %1471 = vmatpush1.msra.mxu0 0.0
    %1472 = vmatprep.subr.mxu0 0.0
    %1473 = vmatpush1.msra.mxu0 0.0
    %1474 = vmatprep.subr.mxu0 0.0
    %1475 = vmatpush1.msra.mxu0 0.0
    %1476 = vmatprep.subr.mxu0 0.0
    %1477 = vmatpush1.msra.mxu0 0.0
    %1478 = vmatprep.subr.mxu0 0.0
    %1479 = vmatpush1.msra.mxu0 0.0
    %1480 = vmatprep.mubr.f32.mxu0 0.0
    %1481 = vmatmul.mubr.f32.gmra.mrb[0].mxu0 %v1411
    %v1482 = vpop.f32.mrb[0].mxu0
    %v1483 = vadd.f32 %v1393, %v1482
    %v1484 = vpop.f32.mrb[0].mxu0
    %1485 = vmatprep.mubr.f32.mxu0 0.0
    %1486 = vmatmul.mubr.f32.gmra.mrb[0].mxu0 %v1414
    %v1487 = vpop.f32.mrb[0].mxu0
    %v1488 = vadd.f32 %v1393, %v1487
    %v1489 = vpop.f32.mrb[0].mxu0
    %1490 = vdwg.mxu0
    %v1491 = vmax.f32 %v1483, 0.0
    %v1492 = vmax.f32 %v1488, 0.0
    %v1493 = vlaneseq
    %v1494 = vshrl.u32 %v1493, 7
    %v1495 = vsub.s32 0, %v1494
    %v1496 = vrot.slane %v95, %v1495
    %vm1497 = vcmask 523264
    %v1499 = vsel %vm1497, %v1491, 0
    %v1502 = vsel %vm1497, %v1492, 0
    %1504 = vmatprep.subr.mxu0 0.0
    %1505 = vmatpush1.msra.mxu0 %v80
    %1506 = vmatprep.subr.mxu0 0.0
    %1507 = vmatpush1.msra.mxu0 %v81
    %1508 = vmatprep.subr.mxu0 0.0
    %1509 = vmatpush1.msra.mxu0 %v82
    %1510 = vmatprep.subr.mxu0 0.0
    %1511 = vmatpush1.msra.mxu0 %v83
    %1512 = vmatprep.subr.mxu0 0.0
    %1513 = vmatpush1.msra.mxu0 %v84
    %1514 = vmatprep.subr.mxu0 0.0
    %1515 = vmatpush1.msra.mxu0 %v85
    %1516 = vmatprep.subr.mxu0 0.0
    %1517 = vmatpush1.msra.mxu0 %v86
    %1518 = vmatprep.subr.mxu0 0.0
    %1519 = vmatpush1.msra.mxu0 %v87
    %1520 = vmatprep.subr.mxu0 0.0
    %1521 = vmatpush1.msra.mxu0 0.0
    %1522 = vmatprep.subr.mxu0 0.0
    %1523 = vmatpush1.msra.mxu0 0.0
    %1524 = vmatprep.subr.mxu0 0.0
    %1525 = vmatpush1.msra.mxu0 0.0
    %1526 = vmatprep.subr.mxu0 0.0
    %1527 = vmatpush1.msra.mxu0 0.0
    %1528 = vmatprep.subr.mxu0 0.0
    %1529 = vmatpush1.msra.mxu0 0.0
    %1530 = vmatprep.subr.mxu0 0.0
    %1531 = vmatpush1.msra.mxu0 0.0
    %1532 = vmatprep.subr.mxu0 0.0
    %1533 = vmatpush1.msra.mxu0 0.0
    %1534 = vmatprep.subr.mxu0 0.0
    %1535 = vmatpush1.msra.mxu0 0.0
    %1536 = vmatprep.subr.mxu0 0.0
    %1537 = vmatpush1.msra.mxu0 0.0
    %1538 = vmatprep.subr.mxu0 0.0
    %1539 = vmatpush1.msra.mxu0 0.0
    %1540 = vmatprep.subr.mxu0 0.0
    %1541 = vmatpush1.msra.mxu0 0.0
    %1542 = vmatprep.subr.mxu0 0.0
    %1543 = vmatpush1.msra.mxu0 0.0
    %1544 = vmatprep.subr.mxu0 0.0
    %1545 = vmatpush1.msra.mxu0 0.0
    %1546 = vmatprep.subr.mxu0 0.0
    %1547 = vmatpush1.msra.mxu0 0.0
    %1548 = vmatprep.subr.mxu0 0.0
    %1549 = vmatpush1.msra.mxu0 0.0
    %1550 = vmatprep.subr.mxu0 0.0
    %1551 = vmatpush1.msra.mxu0 0.0
    %1552 = vmatprep.subr.mxu0 0.0
    %1553 = vmatpush1.msra.mxu0 0.0
    %1554 = vmatprep.subr.mxu0 0.0
    %1555 = vmatpush1.msra.mxu0 0.0
    %1556 = vmatprep.subr.mxu0 0.0
    %1557 = vmatpush1.msra.mxu0 0.0
    %1558 = vmatprep.subr.mxu0 0.0
    %1559 = vmatpush1.msra.mxu0 0.0
    %1560 = vmatprep.subr.mxu0 0.0
    %1561 = vmatpush1.msra.mxu0 0.0
    %1562 = vmatprep.subr.mxu0 0.0
    %1563 = vmatpush1.msra.mxu0 0.0
    %1564 = vmatprep.subr.mxu0 0.0
    %1565 = vmatpush1.msra.mxu0 0.0
    %1566 = vmatprep.subr.mxu0 0.0
    %1567 = vmatpush1.msra.mxu0 0.0
    %1568 = vmatprep.mubr.f32.mxu0 0.0
    %1569 = vmatmul.mubr.f32.gmra.mrb[0].mxu0 %v1499
    %v1570 = vpop.f32.mrb[0].mxu0
    %v1571 = vadd.f32 %v1496, %v1570
    %v1572 = vpop.f32.mrb[0].mxu0
    %1573 = vmatprep.mubr.f32.mxu0 0.0
    %1574 = vmatmul.mubr.f32.gmra.mrb[0].mxu0 %v1502
    %v1575 = vpop.f32.mrb[0].mxu0
    %v1576 = vadd.f32 %v1496, %v1575
    %v1577 = vpop.f32.mrb[0].mxu0
    %1578 = vdwg.mxu0
    %v1579 = vadd.f32 %v1388, %v1571
    %v1580 = vadd.f32 %v1389, %v1576
    %v1581 = vsel %vm109, %v1579, 0.0
    %1582 = vadd.xlane.f32.xlu0 %v1581
    %v1583 = vpop.xlane.xlu0 %1582
    %v1584 = vsel %vm109, %v1580, 0.0
    %1585 = vadd.xlane.f32.xlu0 %v1584
    %v1586 = vpop.xlane.xlu0 %1585
    %v1587 = vmul.f32 %v1583, %v1357
    %v1588 = vmul.f32 %v1586, %v1357
    %v1589 = vsub.f32 %v1579, %v1587
    %v1590 = vsub.f32 %v1580, %v1588
    %v1591 = vmul.f32 %v1589, %v1589
    %v1592 = vmul.f32 %v1590, %v1590
    %v1593 = vsel %vm109, %v1591, 0.0
    %1594 = vadd.xlane.f32.xlu0 %v1593
    %v1595 = vpop.xlane.xlu0 %1594
    %v1596 = vsel %vm109, %v1592, 0.0
    %1597 = vadd.xlane.f32.xlu0 %v1596
    %v1598 = vpop.xlane.xlu0 %1597
    %v1599 = vmul.f32 %v1595, %v1357
    %v1600 = vmul.f32 %v1598, %v1357
    %v1601 = vadd.f32 %v1599, 1e-05
    %v1602 = vadd.f32 %v1600, 1e-05
    %v1603 = vrsqrt.pop %v1601
    %v1604 = vrsqrt.pop %v1602
    %v1605 = vmul.f32 %v1589, %v1603
    %v1606 = vmul.f32 %v1590, %v1604
    %v1607 = vlaneseq
    %v1608 = vshrl.u32 %v1607, 7
    %v1609 = vsub.s32 0, %v1608
    %v1610 = vrot.slane %v92, %v1609
    %v1611 = vmul.f32 %v1605, %v1610
    %v1612 = vmul.f32 %v1606, %v1610
    %v1613 = vlaneseq
    %v1614 = vshrl.u32 %v1613, 7
    %v1615 = vsub.s32 0, %v1614
    %v1616 = vrot.slane %v93, %v1615
    %v1617 = vadd.f32 %v1611, %v1616
    %v1618 = vadd.f32 %v1612, %v1616
    %v1619 = vlaneseq
    %v1620 = vshrl.u32 %v1619, 7
    %v1621 = vsub.s32 0, %v1620
    %v1622 = vrot.slane %v96, %v1621
    %1627 = vrot.lane.b32.xlu0 %v72, 32
    %v1628 = vpop.permute.xlu0 %1627
    %1629 = vrot.lane.b32.xlu0 %v73, 32
    %v1630 = vpop.permute.xlu0 %1629
    %1631 = vrot.lane.b32.xlu0 %v74, 32
    %v1632 = vpop.permute.xlu0 %1631
    %1633 = vrot.lane.b32.xlu0 %v75, 32
    %v1634 = vpop.permute.xlu0 %1633
    %v1640 = vsel %vm109, %v1617, 0
    %v1643 = vsel %vm109, %v1618, 0
    %1645 = vmatprep.subr.mxu0 0.0
    %1646 = vmatpush1.msra.mxu0 %v1628
    %1647 = vmatprep.subr.mxu0 0.0
    %1648 = vmatpush1.msra.mxu0 %v1630
    %1649 = vmatprep.subr.mxu0 0.0
    %1650 = vmatpush1.msra.mxu0 %v1632
    %1651 = vmatprep.subr.mxu0 0.0
    %1652 = vmatpush1.msra.mxu0 %v1634
    %1653 = vmatprep.subr.mxu0 0.0
    %1654 = vmatpush1.msra.mxu0 0.0
    %1655 = vmatprep.subr.mxu0 0.0
    %1656 = vmatpush1.msra.mxu0 0.0
    %1657 = vmatprep.subr.mxu0 0.0
    %1658 = vmatpush1.msra.mxu0 0.0
    %1659 = vmatprep.subr.mxu0 0.0
    %1660 = vmatpush1.msra.mxu0 0.0
    %1661 = vmatprep.subr.mxu0 0.0
    %1662 = vmatpush1.msra.mxu0 0.0
    %1663 = vmatprep.subr.mxu0 0.0
    %1664 = vmatpush1.msra.mxu0 0.0
    %1665 = vmatprep.subr.mxu0 0.0
    %1666 = vmatpush1.msra.mxu0 0.0
    %1667 = vmatprep.subr.mxu0 0.0
    %1668 = vmatpush1.msra.mxu0 0.0
    %1669 = vmatprep.subr.mxu0 0.0
    %1670 = vmatpush1.msra.mxu0 0.0
    %1671 = vmatprep.subr.mxu0 0.0
    %1672 = vmatpush1.msra.mxu0 0.0
    %1673 = vmatprep.subr.mxu0 0.0
    %1674 = vmatpush1.msra.mxu0 0.0
    %1675 = vmatprep.subr.mxu0 0.0
    %1676 = vmatpush1.msra.mxu0 0.0
    %1677 = vmatprep.subr.mxu0 0.0
    %1678 = vmatpush1.msra.mxu0 0.0
    %1679 = vmatprep.subr.mxu0 0.0
    %1680 = vmatpush1.msra.mxu0 0.0
    %1681 = vmatprep.subr.mxu0 0.0
    %1682 = vmatpush1.msra.mxu0 0.0
    %1683 = vmatprep.subr.mxu0 0.0
    %1684 = vmatpush1.msra.mxu0 0.0
    %1685 = vmatprep.subr.mxu0 0.0
    %1686 = vmatpush1.msra.mxu0 0.0
    %1687 = vmatprep.subr.mxu0 0.0
    %1688 = vmatpush1.msra.mxu0 0.0
    %1689 = vmatprep.subr.mxu0 0.0
    %1690 = vmatpush1.msra.mxu0 0.0
    %1691 = vmatprep.subr.mxu0 0.0
    %1692 = vmatpush1.msra.mxu0 0.0
    %1693 = vmatprep.subr.mxu0 0.0
    %1694 = vmatpush1.msra.mxu0 0.0
    %1695 = vmatprep.subr.mxu0 0.0
    %1696 = vmatpush1.msra.mxu0 0.0
    %1697 = vmatprep.subr.mxu0 0.0
    %1698 = vmatpush1.msra.mxu0 0.0
    %1699 = vmatprep.subr.mxu0 0.0
    %1700 = vmatpush1.msra.mxu0 0.0
    %1701 = vmatprep.subr.mxu0 0.0
    %1702 = vmatpush1.msra.mxu0 0.0
    %1703 = vmatprep.subr.mxu0 0.0
    %1704 = vmatpush1.msra.mxu0 0.0
    %1705 = vmatprep.subr.mxu0 0.0
    %1706 = vmatpush1.msra.mxu0 0.0
    %1707 = vmatprep.subr.mxu0 0.0
    %1708 = vmatpush1.msra.mxu0 0.0
    %1709 = vmatprep.mubr.f32.mxu0 0.0
    %1710 = vmatmul.mubr.f32.gmra.mrb[0].mxu0 %v1640
    %v1711 = vpop.f32.mrb[0].mxu0
    %v1712 = vadd.f32 %v1622, %v1711
    %v1713 = vpop.f32.mrb[0].mxu0
    %1714 = vmatprep.mubr.f32.mxu0 0.0
    %1715 = vmatmul.mubr.f32.gmra.mrb[0].mxu0 %v1643
    %v1716 = vpop.f32.mrb[0].mxu0
    %v1717 = vadd.f32 %v1622, %v1716
    %v1718 = vpop.f32.mrb[0].mxu0
    %1719 = vdwg.mxu0
    %1720 = vst.msk [vmem:[%s4] sm:$0xff] %vm197, %v1712
    %1721 = vst.msk [vmem:[%s4 + $0x8] sm:$0xff] %vm197, %v1717
    // Predicated region
    $region34: #{tpu_custom_call.1} parent=1 // pred_check
      _
    $region35: #{tpu_custom_call.1} parent=1 // pred_check_branch
      %1723 = sbr.rel (0) target = $region37
    $region36: #{tpu_custom_call.1} parent=1 // pred_region
      _
    $region37: #{tpu_custom_call.1} parent=1 // pred_fallthru
      _
    // Predicated region
    $region38: #{tpu_custom_call.1} parent=1 // pred_check
      _
    $region39: #{tpu_custom_call.1} parent=1 // pred_check_branch
      %1725 = sbr.rel (0) target = $region41
    $region40: #{tpu_custom_call.1} parent=1 // pred_region
      _
    $region41: #{tpu_custom_call.1} parent=1 // pred_fallthru
      _
    %1726 = vsyncpa [#allocation3], 1
    %1727 = vsyncpa [#allocation5], 1
    %1728 = vsyncpa [#allocation8], 1

</llo_original>
